<compile_context>
chip_gen: v6e
topology: v6e:2x2x1
jax: 0.10.0
libtpu: 0.0.40
codegen_flags: <defaults>
</compile_context>

<pallas_src>
import jax
import jax.numpy as jnp
import numpy as np
from jax.experimental import pallas as pl
from jax.experimental.pallas import tpu as pltpu

POOL_K = 5                                   # AvgPool2d kernel
POOL_S = 2                                   # AvgPool2d stride
EPS = 1e-5                                   # BatchNorm eps
SPATIAL = 7                                  # input H = W
POOLED = (SPATIAL - POOL_K) // POOL_S + 1    # = 2
C_MID = 128                                  # conv1 output channels
C_OUT = 768                                  # conv2 output channels


def _round_up(x, m):
    return ((x + m - 1) // m) * m


def _vmem_capacity_bytes():
    """Per-core VMEM capacity; conservative fallback (v7x) if query unavailable."""
    try:
        info = pltpu.get_tpu_info()
        cap = getattr(info, "vmem_capacity_bytes", None)
        if cap:
            return int(cap)
    except Exception:
        pass
    return 64 << 20


def aux_head_kernel(x_ref, w1_ref, b1_ref, w2_ref, b2_ref, wc_ref, bc_ref, out_ref):
    """relu(x) @ Wbig (+b1, relu) @ W2 (+b2, relu) @ Wc (+bc) -- three MXU matmuls."""
    x = jnp.maximum(x_ref[...], 0.0)                                    # (TB, C*49) f32
    h1 = jnp.dot(x.astype(w1_ref.dtype), w1_ref[...],
                 preferred_element_type=jnp.float32)                    # (TB, 512)
    h1 = jnp.maximum(h1 + b1_ref[...], 0.0)                             # BN1 shift + ReLU (f32)
    h2 = jnp.dot(h1.astype(w2_ref.dtype), w2_ref[...],
                 preferred_element_type=jnp.float32)                    # (TB, 768)
    h2 = jnp.maximum(h2 + b2_ref[...], 0.0)                             # BN2 shift + ReLU (f32)
    out = jnp.dot(h2.astype(wc_ref.dtype), wc_ref[...],
                  preferred_element_type=jnp.float32) + bc_ref[...]     # (TB, ncls_pad)
    out_ref[...] = out.astype(out_ref.dtype)


def _pick_batch_tile(B, kdim, ncls_pad, weight_bytes, block_b, vmem_budget):
    """Largest multiple-of-8 batch tile whose working set fits the VMEM budget."""
    tb = min(max(8, (block_b // 8) * 8), _round_up(B, 8))

    def est(t):
        x_io = 2 * t * kdim * 4                       # double-buffered f32 input tile
        out_io = 2 * t * ncls_pad * 4                 # double-buffered f32 output tile
        live = t * (kdim * 2                          # bf16 cast of x
                    + 6 * POOLED * POOLED * C_MID     # h1 f32 + bf16
                    + 6 * C_OUT                       # h2 f32 + bf16
                    + 4 * ncls_pad)                   # out f32
        return weight_bytes + x_io + out_io + live + (4 << 20)

    while tb > 8 and est(tb) > vmem_budget:
        tb = max(8, ((tb // 2) // 8) * 8)
    return tb, est(tb)


def auxiliary_head_imagenet(x, params, num_classes, *, block_b=256):
    """Pallas wrapper: lane-dense 2D slab, batch-tiled grid, resident bf16 weights."""
    B, C, H, W = x.shape
    assert (H, W) == (SPATIAL, SPATIAL), "head expects 7x7 input (2x2 pooled map -> Linear(768))"
    kdim = C * H * W
    ncls_pad = params["wc"].shape[1]

    x2d = x.reshape(B, kdim)                 # (c, h, w) row-major: matches Wbig row order

    weights = (params["w1"], params["b1"], params["w2"], params["b2"],
               params["wc"], params["bc"])
    weight_bytes = sum(int(np.prod(wa.shape)) * jnp.dtype(wa.dtype).itemsize
                       for wa in weights)

    vmem_cap = _vmem_capacity_bytes()
    tb, est_bytes = _pick_batch_tile(B, kdim, ncls_pad, weight_bytes, block_b,
                                     int(0.9 * vmem_cap))
    b_pad = _round_up(B, tb)
    if b_pad != B:
        x2d = jnp.pad(x2d, ((0, b_pad - B), (0, 0)))

    grid = (b_pad // tb,)
    # Constant index maps -> weights stay resident in VMEM across batch tiles.
    weight_specs = [pl.BlockSpec(wa.shape, lambda i: (0, 0)) for wa in weights]

    vmem_limit = min(int(est_bytes + weight_bytes) + (8 << 20), vmem_cap)

    flops = 2 * b_pad * (kdim * POOLED * POOLED * C_MID
                         + POOLED * POOLED * C_MID * C_OUT
                         + C_OUT * ncls_pad)
    bytes_accessed = int(x2d.size * 4 + weight_bytes + b_pad * ncls_pad * 4)

    out = pl.pallas_call(
        aux_head_kernel,
        out_shape=jax.ShapeDtypeStruct((b_pad, ncls_pad), jnp.float32),
        grid=grid,
        in_specs=[pl.BlockSpec((tb, kdim), lambda i: (i, 0))] + weight_specs,
        out_specs=pl.BlockSpec((tb, ncls_pad), lambda i: (i, 0)),
        compiler_params=pltpu.CompilerParams(
            dimension_semantics=("parallel",),
            vmem_limit_bytes=vmem_limit,
        ),
        cost_estimate=pl.CostEstimate(flops=flops, transcendentals=0,
                                      bytes_accessed=bytes_accessed),
    )(x2d, *weights)
    return out[:B, :num_classes]


def init_params(key, C, num_classes):
    """Synthetic PyTorch-shaped parameters + folded / fused kernel parameters."""
    ks = jax.random.split(key, 12)
    torch_params = dict(
        conv1_w=0.05 * jax.random.normal(ks[0], (C_MID, C, 1, 1), jnp.float32),
        bn1_gamma=1.0 + 0.1 * jax.random.normal(ks[1], (C_MID,), jnp.float32),
        bn1_beta=0.1 * jax.random.normal(ks[2], (C_MID,), jnp.float32),
        bn1_mean=0.1 * jax.random.normal(ks[3], (C_MID,), jnp.float32),
        bn1_var=1.0 + 0.1 * jnp.abs(jax.random.normal(ks[4], (C_MID,), jnp.float32)),
        conv2_w=0.05 * jax.random.normal(ks[5], (C_OUT, C_MID, 2, 2), jnp.float32),
        bn2_gamma=1.0 + 0.1 * jax.random.normal(ks[6], (C_OUT,), jnp.float32),
        bn2_beta=0.1 * jax.random.normal(ks[7], (C_OUT,), jnp.float32),
        bn2_mean=0.1 * jax.random.normal(ks[8], (C_OUT,), jnp.float32),
        bn2_var=1.0 + 0.1 * jnp.abs(jax.random.normal(ks[9], (C_OUT,), jnp.float32)),
        fc_w=0.05 * jax.random.normal(ks[10], (num_classes, C_OUT), jnp.float32),
        fc_b=0.1 * jax.random.normal(ks[11], (num_classes,), jnp.float32),
    )

    def fold_bn(gamma, beta, mean, var):
        s = gamma / jnp.sqrt(var + EPS)
        return s, beta - mean * s

    s1, b1 = fold_bn(torch_params["bn1_gamma"], torch_params["bn1_beta"],
                     torch_params["bn1_mean"], torch_params["bn1_var"])
    s2, b2 = fold_bn(torch_params["bn2_gamma"], torch_params["bn2_beta"],
                     torch_params["bn2_mean"], torch_params["bn2_var"])

    # Combined AvgPool(5,2) + Conv1x1 + BN1-scale weight, shape (C*49, 4*128):
    #   Wbig[c*49 + h*7 + w, t*128 + o] = mask[h,w,t]/25 * conv1_w[o,c] * s1[o]
    mask = np.zeros((SPATIAL, SPATIAL, POOLED * POOLED), np.float32)
    for ph in range(POOLED):
        for pw in range(POOLED):
            mask[ph * POOL_S:ph * POOL_S + POOL_K,
                 pw * POOL_S:pw * POOL_S + POOL_K,
                 ph * POOLED + pw] = 1.0 / (POOL_K * POOL_K)
    w1_oc = torch_params["conv1_w"].reshape(C_MID, C)
    wbig = jnp.einsum("hwt,oc,o->chwto", jnp.asarray(mask), w1_oc, s1)
    wbig = wbig.reshape(C * SPATIAL * SPATIAL, POOLED * POOLED * C_MID)

    # Conv2d(128,768,2) over the 2x2 pooled map, flattened in (kh,kw,c_in) order,
    # with BN2 scale folded into the output columns.
    w2 = jnp.transpose(torch_params["conv2_w"], (2, 3, 1, 0)).reshape(
        POOLED * POOLED * C_MID, C_OUT)
    w2 = w2 * s2[None, :]

    # Classifier padded to a lane-dense (multiple-of-128) output width.
    ncls_pad = _round_up(num_classes, 128)
    wc = jnp.zeros((C_OUT, ncls_pad), jnp.float32).at[:, :num_classes].set(
        torch_params["fc_w"].T)
    bc = jnp.zeros((1, ncls_pad), jnp.float32).at[:, :num_classes].set(
        torch_params["fc_b"])

    kernel_params = dict(
        w1=wbig.astype(jnp.bfloat16),
        b1=jnp.tile(b1, POOLED * POOLED).reshape(1, POOLED * POOLED * C_MID),
        w2=w2.astype(jnp.bfloat16),
        b2=b2.reshape(1, C_OUT),
        wc=wc.astype(jnp.bfloat16),
        bc=bc,
    )
    return kernel_params, torch_params


def reference_forward(x, tp):
    """Pure-JAX (XLA, f32) reference with the original PyTorch parameter shapes."""
    def bn(h, gamma, beta, mean, var):
        return (h - mean[None, :, None, None]) / jnp.sqrt(var[None, :, None, None] + EPS) \
               * gamma[None, :, None, None] + beta[None, :, None, None]

    h = jnp.maximum(x, 0.0)
    h = jax.lax.reduce_window(h, 0.0, jax.lax.add,
                              (1, 1, POOL_K, POOL_K), (1, 1, POOL_S, POOL_S),
                              "VALID") / float(POOL_K * POOL_K)
    h = jax.lax.conv_general_dilated(h, tp["conv1_w"], (1, 1), "VALID",
                                     dimension_numbers=("NCHW", "OIHW", "NCHW"))
    h = jnp.maximum(bn(h, tp["bn1_gamma"], tp["bn1_beta"], tp["bn1_mean"], tp["bn1_var"]), 0.0)
    h = jax.lax.conv_general_dilated(h, tp["conv2_w"], (1, 1), "VALID",
                                     dimension_numbers=("NCHW", "OIHW", "NCHW"))
    h = jnp.maximum(bn(h, tp["bn2_gamma"], tp["bn2_beta"], tp["bn2_mean"], tp["bn2_var"]), 0.0)
    h = h.reshape(h.shape[0], -1)                                       # (B, 768)
    return h @ tp["fc_w"].T + tp["fc_b"]


if __name__ == "__main__":
    B, C, NUM_CLASSES = 2, 8, 10
    key = jax.random.PRNGKey(0)
    kx, kp = jax.random.split(key)

    x = jax.random.normal(kx, (B, C, SPATIAL, SPATIAL), jnp.float32)
    params, torch_params = init_params(kp, C, NUM_CLASSES)

    out = jax.block_until_ready(auxiliary_head_imagenet(x, params, NUM_CLASSES))
    ref = reference_forward(x, torch_params)

    assert out.shape == (B, NUM_CLASSES), out.shape
    assert bool(jnp.all(jnp.isfinite(out)))
    max_err = float(jnp.max(jnp.abs(out - ref)))
    assert jnp.allclose(out, ref, rtol=2e-2, atol=2e-2), max_err  # bf16 weights, f32 accumulation
    print("KERNEL_OK")
</pallas_src>

<mosaic_0001>
module attributes {stable_mosaic.version = 11 : i64} {
  func.func @aux_head_kernel(%arg0: i32, %arg1: memref<8x392xf32, #tpu.memory_space<vmem>>, %arg2: memref<392x512xbf16, #tpu.memory_space<vmem>>, %arg3: memref<1x512xf32, #tpu.memory_space<vmem>>, %arg4: memref<512x768xbf16, #tpu.memory_space<vmem>>, %arg5: memref<1x768xf32, #tpu.memory_space<vmem>>, %arg6: memref<768x128xbf16, #tpu.memory_space<vmem>>, %arg7: memref<1x128xf32, #tpu.memory_space<vmem>>, %arg8: memref<8x128xf32, #tpu.memory_space<vmem>>) attributes {dimension_semantics = [#tpu.dimension_semantics<parallel>], iteration_bounds = array<i64: 1>, scalar_prefetch = 0 : i64, scratch_operands = 0 : i64, tpu.core_type = #tpu.core_type<tc>, window_params = [{transform_indices = @transform_0, window_bounds = array<i64: 8, 392>}, {pipeline_mode = #tpu.pipeline_mode<synchronous>, transform_indices = @transform_1, window_bounds = array<i64: 392, 512>}, {pipeline_mode = #tpu.pipeline_mode<synchronous>, transform_indices = @transform_2, window_bounds = array<i64: 1, 512>}, {pipeline_mode = #tpu.pipeline_mode<synchronous>, transform_indices = @transform_3, window_bounds = array<i64: 512, 768>}, {pipeline_mode = #tpu.pipeline_mode<synchronous>, transform_indices = @transform_4, window_bounds = array<i64: 1, 768>}, {pipeline_mode = #tpu.pipeline_mode<synchronous>, transform_indices = @transform_5, window_bounds = array<i64: 768, 128>}, {pipeline_mode = #tpu.pipeline_mode<synchronous>, transform_indices = @transform_6, window_bounds = array<i64: 1, 128>}, {transform_indices = @transform_7, window_bounds = array<i64: 8, 128>}]} {
    %c0 = arith.constant 0 : index
    %c0_0 = arith.constant 0 : index
    %0 = vector.load %arg1[%c0, %c0_0] : memref<8x392xf32, #tpu.memory_space<vmem>>, vector<8x392xf32>
    %cst = arith.constant 0.000000e+00 : f32
    %1 = vector.broadcast %cst : f32 to vector<8x392xf32>
    %2 = arith.maximumf %0, %1 : vector<8x392xf32>
    %3 = arith.truncf %2 : vector<8x392xf32> to vector<8x392xbf16>
    %c0_1 = arith.constant 0 : index
    %c0_2 = arith.constant 0 : index
    %4 = vector.load %arg2[%c0_1, %c0_2] : memref<392x512xbf16, #tpu.memory_space<vmem>>, vector<392x512xbf16>
    %cst_3 = arith.constant dense<0.000000e+00> : vector<8x512xf32>
    %5 = tpu.matmul %3, %4, %cst_3 {dimension_numbers = #tpu.dot_dimension_numbers<[1], [0], [0], [1], [0, 0, 1, 1], [], []>} : vector<8x392xbf16>, vector<392x512xbf16>, vector<8x512xf32> -> vector<8x512xf32>
    %c0_4 = arith.constant 0 : index
    %c0_5 = arith.constant 0 : index
    %6 = vector.load %arg3[%c0_4, %c0_5] : memref<1x512xf32, #tpu.memory_space<vmem>>, vector<1x512xf32>
    %7 = vector.broadcast %6 : vector<1x512xf32> to vector<8x512xf32>
    %8 = arith.addf %5, %7 : vector<8x512xf32>
    %cst_6 = arith.constant 0.000000e+00 : f32
    %9 = vector.broadcast %cst_6 : f32 to vector<8x512xf32>
    %10 = arith.maximumf %8, %9 : vector<8x512xf32>
    %11 = arith.truncf %10 : vector<8x512xf32> to vector<8x512xbf16>
    %c0_7 = arith.constant 0 : index
    %c0_8 = arith.constant 0 : index
    %12 = vector.load %arg4[%c0_7, %c0_8] : memref<512x768xbf16, #tpu.memory_space<vmem>>, vector<512x768xbf16>
    %cst_9 = arith.constant dense<0.000000e+00> : vector<8x768xf32>
    %13 = tpu.matmul %11, %12, %cst_9 {dimension_numbers = #tpu.dot_dimension_numbers<[1], [0], [0], [1], [0, 0, 1, 1], [], []>} : vector<8x512xbf16>, vector<512x768xbf16>, vector<8x768xf32> -> vector<8x768xf32>
    %c0_10 = arith.constant 0 : index
    %c0_11 = arith.constant 0 : index
    %14 = vector.load %arg5[%c0_10, %c0_11] : memref<1x768xf32, #tpu.memory_space<vmem>>, vector<1x768xf32>
    %15 = vector.broadcast %14 : vector<1x768xf32> to vector<8x768xf32>
    %16 = arith.addf %13, %15 : vector<8x768xf32>
    %cst_12 = arith.constant 0.000000e+00 : f32
    %17 = vector.broadcast %cst_12 : f32 to vector<8x768xf32>
    %18 = arith.maximumf %16, %17 : vector<8x768xf32>
    %19 = arith.truncf %18 : vector<8x768xf32> to vector<8x768xbf16>
    %c0_13 = arith.constant 0 : index
    %c0_14 = arith.constant 0 : index
    %20 = vector.load %arg6[%c0_13, %c0_14] : memref<768x128xbf16, #tpu.memory_space<vmem>>, vector<768x128xbf16>
    %cst_15 = arith.constant dense<0.000000e+00> : vector<8x128xf32>
    %21 = tpu.matmul %19, %20, %cst_15 {dimension_numbers = #tpu.dot_dimension_numbers<[1], [0], [0], [1], [0, 0, 1, 1], [], []>} : vector<8x768xbf16>, vector<768x128xbf16>, vector<8x128xf32> -> vector<8x128xf32>
    %c0_16 = arith.constant 0 : index
    %c0_17 = arith.constant 0 : index
    %22 = vector.load %arg7[%c0_16, %c0_17] : memref<1x128xf32, #tpu.memory_space<vmem>>, vector<1x128xf32>
    %23 = vector.broadcast %22 : vector<1x128xf32> to vector<8x128xf32>
    %24 = arith.addf %21, %23 : vector<8x128xf32>
    %c0_18 = arith.constant 0 : index
    %c0_19 = arith.constant 0 : index
    %25 = vector.load %arg8[%c0_18, %c0_19] : memref<8x128xf32, #tpu.memory_space<vmem>>, vector<8x128xf32>
    tpu.vector_store %arg8[%c0_18, %c0_19], %24 {strides = array<i32>} : memref<8x128xf32, #tpu.memory_space<vmem>>, vector<8x128xf32>,
    return
  }
  func.func @transform_0(%arg0: i32) -> (i32, i32) {
    %c0_i32 = arith.constant 0 : i32
    %c0_i32_0 = arith.constant 0 : i32
    return %arg0, %c0_i32 : i32, i32
  }
  func.func @transform_1(%arg0: i32) -> (i32, i32) {
    %c0_i32 = arith.constant 0 : i32
    %c0_i32_0 = arith.constant 0 : i32
    %c0_i32_1 = arith.constant 0 : i32
    return %c0_i32, %c0_i32_0 : i32, i32
  }
  func.func @transform_2(%arg0: i32) -> (i32, i32) {
    %c0_i32 = arith.constant 0 : i32
    %c0_i32_0 = arith.constant 0 : i32
    %c0_i32_1 = arith.constant 0 : i32
    return %c0_i32, %c0_i32_0 : i32, i32
  }
  func.func @transform_3(%arg0: i32) -> (i32, i32) {
    %c0_i32 = arith.constant 0 : i32
    %c0_i32_0 = arith.constant 0 : i32
    %c0_i32_1 = arith.constant 0 : i32
    return %c0_i32, %c0_i32_0 : i32, i32
  }
  func.func @transform_4(%arg0: i32) -> (i32, i32) {
    %c0_i32 = arith.constant 0 : i32
    %c0_i32_0 = arith.constant 0 : i32
    %c0_i32_1 = arith.constant 0 : i32
    return %c0_i32, %c0_i32_0 : i32, i32
  }
  func.func @transform_5(%arg0: i32) -> (i32, i32) {
    %c0_i32 = arith.constant 0 : i32
    %c0_i32_0 = arith.constant 0 : i32
    %c0_i32_1 = arith.constant 0 : i32
    return %c0_i32, %c0_i32_0 : i32, i32
  }
  func.func @transform_6(%arg0: i32) -> (i32, i32) {
    %c0_i32 = arith.constant 0 : i32
    %c0_i32_0 = arith.constant 0 : i32
    %c0_i32_1 = arith.constant 0 : i32
    return %c0_i32, %c0_i32_0 : i32, i32
  }
  func.func @transform_7(%arg0: i32) -> (i32, i32) {
    %c0_i32 = arith.constant 0 : i32
    %c0_i32_0 = arith.constant 0 : i32
    return %arg0, %c0_i32 : i32, i32
  }
}

</mosaic_0001>

<llo_original>
// kernel: tpu_custom_call.1
$region0: #{tpu_custom_call.1}
  #allocation0 [shape = 'u32[]', space=smem, size = 0x4, offset = 0x4, fixed_abs, tag = 'smem constant byte address 0x4 - core index']
  #allocation1 [shape = 'u32[144,128]{1,0:T(1,128)}', space=vmem, size = 0x12000, scoped, tag = 'internal scratch']
  %s0 = inlined_call_operand.hbm [shape: f32[8,392], index: 0, kind: input, shape index: {}]
  %s1 = inlined_call_operand.hbm [shape: bf16[392,512], index: 1, kind: input, shape index: {}]
  %s2 = inlined_call_operand.hbm [shape: f32[1,512], index: 2, kind: input, shape index: {}]
  %s3 = inlined_call_operand.hbm [shape: bf16[512,768], index: 3, kind: input, shape index: {}]
  %s4 = inlined_call_operand.vmem [shape: f32[1,768], index: 4, kind: input, shape index: {}]
  %s5 = inlined_call_operand.hbm [shape: bf16[768,128], index: 5, kind: input, shape index: {}]
  %s6 = inlined_call_operand.vmem [shape: f32[1,128], index: 6, kind: input, shape index: {}]
  %s7 = inlined_call_operand.hbm [shape: f32[8,128], index: 7, kind: output, shape index: {}]
  %s8 = sld [smem:[#allocation0]]
  $region58: #{tpu_custom_call.1} parent=0
    _
  %s10 = ssub.s32 1, %s8
  %s11 = scalar_select 0, %s10, %s8
  $region1: #{tpu_custom_call.1} parent=0
    #allocation2 [shape = 'u8[16384]{0}', space=vmem, size = 0x4000, scoped, tag = 'input window, operand 0, single buffered']
    #allocation3 [shape = 's32[1]{0}', space=sflag, size = 0x4, scoped, tag = 'scoped memory for tpu_custom_call.1']
    #allocation4 [shape = 's32[1]{0}', space=sflag, size = 0x4, scoped, tag = 'scoped memory for tpu_custom_call.1']
    #allocation5 [shape = 'u8[401408]{0}', space=vmem, size = 0x62000, scoped, tag = 'input window, operand 1, single buffered']
    #allocation6 [shape = 's32[1]{0}', space=sflag, size = 0x4, scoped, tag = 'scoped memory for tpu_custom_call.1']
    #allocation7 [shape = 'u8[2048]{0}', space=vmem, size = 0x800, scoped, tag = 'input window, operand 2, single buffered']
    #allocation8 [shape = 'u8[786432]{0}', space=vmem, size = 0xc0000, scoped, tag = 'input window, operand 3, single buffered']
    #allocation9 [shape = 's32[1]{0}', space=sflag, size = 0x4, scoped, tag = 'scoped memory for tpu_custom_call.1']
    #allocation10 [shape = 'u8[196608]{0}', space=vmem, size = 0x30000, scoped, tag = 'input window, operand 5, single buffered']
    #allocation11 [shape = 'u8[4096]{0}', space=vmem, size = 0x1000, scoped, tag = 'output window, operand 0, single buffered']
    %12 = vsyncpa [#allocation3], 0
    %13 = vsyncpa [#allocation6], 0
    %14 = vsyncpa [#allocation9], 0
    %15 = vsyncpa [#allocation4], 0
    // Predicated region
    $region2: #{tpu_custom_call.1} parent=1 // pred_check
      _
    $region3: #{tpu_custom_call.1} parent=1 // pred_check_branch
      %17 = sbr.rel (0) target = $region5
    $region4: #{tpu_custom_call.1} parent=1 // pred_region
      %s19 = ssub.s32 512, 512
      %20 = vsyncadd [#allocation3], %s19
      %s22 = sshll.u32 [#allocation2], 4
      %s23 = int_to_ptr.vmem [resolvable:$true] %s22
      %25 = dma.hbm_to_vmem [thread:$0]  %s0, 512, %s23, [#allocation3]
    $region5: #{tpu_custom_call.1} parent=1 // pred_fallthru
      _
    // Predicated region
    $region6: #{tpu_custom_call.1} parent=1 // pred_check
      _
    $region7: #{tpu_custom_call.1} parent=1 // pred_check_branch
      %27 = sbr.rel (0) target = $region9
    $region8: #{tpu_custom_call.1} parent=1 // pred_region
      %s29 = ssub.s32 12544, 12544
      %30 = vsyncadd [#allocation6], %s29
      %s31 = sshll.u32 [#allocation5], 4
      %s32 = int_to_ptr.vmem [resolvable:$true] %s31
      %37 = dma.hbm_to_vmem [thread:$0]  %s1, 12544, %s32, [#allocation6], 256, 256, 16
    $region9: #{tpu_custom_call.1} parent=1 // pred_fallthru
      _
    // Predicated region
    $region10: #{tpu_custom_call.1} parent=1 // pred_check
      _
    $region11: #{tpu_custom_call.1} parent=1 // pred_check_branch
      %39 = sbr.rel (0) target = $region13
    $region12: #{tpu_custom_call.1} parent=1 // pred_region
      %s41 = ssub.s32 64, 64
      %42 = vsyncadd [#allocation6], %s41
      %s44 = sshll.u32 [#allocation7], 4
      %s45 = int_to_ptr.vmem [resolvable:$true] %s44
      %47 = dma.hbm_to_vmem [thread:$0]  %s2, 64, %s45, [#allocation6]
    $region13: #{tpu_custom_call.1} parent=1 // pred_fallthru
      _
    // Predicated region
    $region14: #{tpu_custom_call.1} parent=1 // pred_check
      _
    $region15: #{tpu_custom_call.1} parent=1 // pred_check_branch
      %49 = sbr.rel (0) target = $region17
    $region16: #{tpu_custom_call.1} parent=1 // pred_region
      %s51 = ssub.s32 24576, 24576
      %52 = vsyncadd [#allocation9], %s51
      %s53 = sshll.u32 [#allocation8], 4
      %s54 = int_to_ptr.vmem [resolvable:$true] %s53
      %59 = dma.hbm_to_vmem [thread:$0]  %s3, 24576, %s54, [#allocation9], 384, 384, 24
    $region17: #{tpu_custom_call.1} parent=1 // pred_fallthru
      _
    // Predicated region
    $region18: #{tpu_custom_call.1} parent=1 // pred_check
      _
    $region19: #{tpu_custom_call.1} parent=1 // pred_check_branch
      %61 = sbr.rel (0) target = $region21
    $region20: #{tpu_custom_call.1} parent=1 // pred_region
      _
    $region21: #{tpu_custom_call.1} parent=1 // pred_fallthru
      _
    // Predicated region
    $region22: #{tpu_custom_call.1} parent=1 // pred_check
      _
    $region23: #{tpu_custom_call.1} parent=1 // pred_check_branch
      %63 = sbr.rel (0) target = $region25
    $region24: #{tpu_custom_call.1} parent=1 // pred_region
      %s65 = ssub.s32 6144, 6144
      %66 = vsyncadd [#allocation9], %s65
      %s67 = sshll.u32 [#allocation10], 4
      %s68 = int_to_ptr.vmem [resolvable:$true] %s67
      %73 = dma.hbm_to_vmem [thread:$0]  %s5, 6144, %s68, [#allocation9], 64, 64, 4
    $region25: #{tpu_custom_call.1} parent=1 // pred_fallthru
      _
    // Predicated region
    $region26: #{tpu_custom_call.1} parent=1 // pred_check
      _
    $region27: #{tpu_custom_call.1} parent=1 // pred_check_branch
      %75 = sbr.rel (0) target = $region29
    $region28: #{tpu_custom_call.1} parent=1 // pred_region
      _
    $region29: #{tpu_custom_call.1} parent=1 // pred_fallthru
      _
    // Predicated region
    $region30: #{tpu_custom_call.1} parent=1 // pred_check
      _
    $region31: #{tpu_custom_call.1} parent=1 // pred_check_branch
      %77 = sbr.rel (0) target = $region33
    $region32: #{tpu_custom_call.1} parent=1 // pred_region
      %78 = dma.done [#allocation3], 512
    $region33: #{tpu_custom_call.1} parent=1 // pred_fallthru
      _
    // Predicated region
    $region34: #{tpu_custom_call.1} parent=1 // pred_check
      _
    $region35: #{tpu_custom_call.1} parent=1 // pred_check_branch
      %80 = sbr.rel (0) target = $region37
    $region36: #{tpu_custom_call.1} parent=1 // pred_region
      %81 = dma.done [#allocation6], 12544
    $region37: #{tpu_custom_call.1} parent=1 // pred_fallthru
      _
    // Predicated region
    $region38: #{tpu_custom_call.1} parent=1 // pred_check
      _
    $region39: #{tpu_custom_call.1} parent=1 // pred_check_branch
      %83 = sbr.rel (0) target = $region41
    $region40: #{tpu_custom_call.1} parent=1 // pred_region
      %84 = dma.done [#allocation6], 64
    $region41: #{tpu_custom_call.1} parent=1 // pred_fallthru
      _
    // Predicated region
    $region42: #{tpu_custom_call.1} parent=1 // pred_check
      _
    $region43: #{tpu_custom_call.1} parent=1 // pred_check_branch
      %86 = sbr.rel (0) target = $region45
    $region44: #{tpu_custom_call.1} parent=1 // pred_region
      %87 = dma.done [#allocation9], 24576
    $region45: #{tpu_custom_call.1} parent=1 // pred_fallthru
      _
    // Predicated region
    $region46: #{tpu_custom_call.1} parent=1 // pred_check
      _
    $region47: #{tpu_custom_call.1} parent=1 // pred_check_branch
      %89 = sbr.rel (0) target = $region49
    $region48: #{tpu_custom_call.1} parent=1 // pred_region
      %90 = dma.done [#allocation9], 6144
    $region49: #{tpu_custom_call.1} parent=1 // pred_fallthru
      _
    %v92 = vld [vmem:[#allocation2] sm:$0xff]
    %v93 = vld [vmem:[#allocation2 + $0x8] sm:$0xff]
    %v94 = vld [vmem:[#allocation2 + $0x10] sm:$0xff]
    %v95 = vld [vmem:[#allocation2 + $0x18] sm:$0xff]
    %v96 = vmax.f32 %v92, 0.0
    %v97 = vmax.f32 %v93, 0.0
    %v98 = vmax.f32 %v94, 0.0
    %v99 = vmax.f32 %v95, 0.0
    %v100 = vpack.c.bf16 %v96, %v96
    %v101 = vpack.c.bf16 %v97, %v97
    %v102 = vpack.c.bf16 %v98, %v98
    %v103 = vpack.c.bf16 %v99, %v99
    %v104 = vld [vmem:[#allocation5] sm:$0xff]
    %v105 = vld [vmem:[#allocation5 + $0x8] sm:$0xff]
    %v106 = vld [vmem:[#allocation5 + $0x10] sm:$0xff]
    %v107 = vld [vmem:[#allocation5 + $0x18] sm:$0xff]
    %v108 = vld [vmem:[#allocation5 + $0x20] sm:$0xff]
    %v109 = vld [vmem:[#allocation5 + $0x28] sm:$0xff]
    %v110 = vld [vmem:[#allocation5 + $0x30] sm:$0xff]
    %v111 = vld [vmem:[#allocation5 + $0x38] sm:$0xff]
    %v112 = vld [vmem:[#allocation5 + $0x40] sm:$0xff]
    %v113 = vld [vmem:[#allocation5 + $0x48] sm:$0xff]
    %v114 = vld [vmem:[#allocation5 + $0x50] sm:$0xff]
    %v115 = vld [vmem:[#allocation5 + $0x58] sm:$0xff]
    %v116 = vld [vmem:[#allocation5 + $0x60] sm:$0xff]
    %v117 = vld [vmem:[#allocation5 + $0x68] sm:$0xff]
    %v118 = vld [vmem:[#allocation5 + $0x70] sm:$0xff]
    %v119 = vld [vmem:[#allocation5 + $0x78] sm:$0xff]
    %v120 = vld [vmem:[#allocation5 + $0x80] sm:$0xff]
    %v121 = vld [vmem:[#allocation5 + $0x88] sm:$0xff]
    %v122 = vld [vmem:[#allocation5 + $0x90] sm:$0xff]
    %v123 = vld [vmem:[#allocation5 + $0x98] sm:$0xff]
    %v124 = vld [vmem:[#allocation5 + $0xa0] sm:$0xff]
    %v125 = vld [vmem:[#allocation5 + $0xa8] sm:$0xff]
    %v126 = vld [vmem:[#allocation5 + $0xb0] sm:$0xff]
    %v127 = vld [vmem:[#allocation5 + $0xb8] sm:$0xff]
    %v128 = vld [vmem:[#allocation5 + $0xc0] sm:$0xff]
    %v129 = vld [vmem:[#allocation5 + $0xc8] sm:$0xff]
    %v130 = vld [vmem:[#allocation5 + $0xd0] sm:$0xff]
    %v131 = vld [vmem:[#allocation5 + $0xd8] sm:$0xff]
    %v132 = vld [vmem:[#allocation5 + $0xe0] sm:$0xff]
    %v133 = vld [vmem:[#allocation5 + $0xe8] sm:$0xff]
    %v134 = vld [vmem:[#allocation5 + $0xf0] sm:$0xff]
    %v135 = vld [vmem:[#allocation5 + $0xf8] sm:$0xff]
    %v136 = vld [vmem:[#allocation5 + $0x100] sm:$0xff]
    %v137 = vld [vmem:[#allocation5 + $0x108] sm:$0xff]
    %v138 = vld [vmem:[#allocation5 + $0x110] sm:$0xff]
    %v139 = vld [vmem:[#allocation5 + $0x118] sm:$0xff]
    %v140 = vld [vmem:[#allocation5 + $0x120] sm:$0xff]
    %v141 = vld [vmem:[#allocation5 + $0x128] sm:$0xff]
    %v142 = vld [vmem:[#allocation5 + $0x130] sm:$0xff]
    %v143 = vld [vmem:[#allocation5 + $0x138] sm:$0xff]
    %v144 = vld [vmem:[#allocation5 + $0x140] sm:$0xff]
    %v145 = vld [vmem:[#allocation5 + $0x148] sm:$0xff]
    %v146 = vld [vmem:[#allocation5 + $0x150] sm:$0xff]
    %v147 = vld [vmem:[#allocation5 + $0x158] sm:$0xff]
    %v148 = vld [vmem:[#allocation5 + $0x160] sm:$0xff]
    %v149 = vld [vmem:[#allocation5 + $0x168] sm:$0xff]
    %v150 = vld [vmem:[#allocation5 + $0x170] sm:$0xff]
    %v151 = vld [vmem:[#allocation5 + $0x178] sm:$0xff]
    %v152 = vld [vmem:[#allocation5 + $0x180] sm:$0xff]
    %v153 = vld [vmem:[#allocation5 + $0x188] sm:$0xff]
    %v154 = vld [vmem:[#allocation5 + $0x190] sm:$0xff]
    %v155 = vld [vmem:[#allocation5 + $0x198] sm:$0xff]
    %v156 = vld [vmem:[#allocation5 + $0x1a0] sm:$0xff]
    %v157 = vld [vmem:[#allocation5 + $0x1a8] sm:$0xff]
    %v158 = vld [vmem:[#allocation5 + $0x1b0] sm:$0xff]
    %v159 = vld [vmem:[#allocation5 + $0x1b8] sm:$0xff]
    %v160 = vld [vmem:[#allocation5 + $0x1c0] sm:$0xff]
    %v161 = vld [vmem:[#allocation5 + $0x1c8] sm:$0xff]
    %v162 = vld [vmem:[#allocation5 + $0x1d0] sm:$0xff]
    %v163 = vld [vmem:[#allocation5 + $0x1d8] sm:$0xff]
    %v164 = vld [vmem:[#allocation5 + $0x1e0] sm:$0xff]
    %v165 = vld [vmem:[#allocation5 + $0x1e8] sm:$0xff]
    %v166 = vld [vmem:[#allocation5 + $0x1f0] sm:$0xff]
    %v167 = vld [vmem:[#allocation5 + $0x1f8] sm:$0xff]
    %v168 = vld [vmem:[#allocation5 + $0x200] sm:$0xff]
    %v169 = vld [vmem:[#allocation5 + $0x208] sm:$0xff]
    %v170 = vld [vmem:[#allocation5 + $0x210] sm:$0xff]
    %v171 = vld [vmem:[#allocation5 + $0x218] sm:$0xff]
    %v172 = vld [vmem:[#allocation5 + $0x220] sm:$0xff]
    %v173 = vld [vmem:[#allocation5 + $0x228] sm:$0xff]
    %v174 = vld [vmem:[#allocation5 + $0x230] sm:$0xff]
    %v175 = vld [vmem:[#allocation5 + $0x238] sm:$0xff]
    %v176 = vld [vmem:[#allocation5 + $0x240] sm:$0xff]
    %v177 = vld [vmem:[#allocation5 + $0x248] sm:$0xff]
    %v178 = vld [vmem:[#allocation5 + $0x250] sm:$0xff]
    %v179 = vld [vmem:[#allocation5 + $0x258] sm:$0xff]
    %v180 = vld [vmem:[#allocation5 + $0x260] sm:$0xff]
    %v181 = vld [vmem:[#allocation5 + $0x268] sm:$0xff]
    %v182 = vld [vmem:[#allocation5 + $0x270] sm:$0xff]
    %v183 = vld [vmem:[#allocation5 + $0x278] sm:$0xff]
    %v184 = vld [vmem:[#allocation5 + $0x280] sm:$0xff]
    %v185 = vld [vmem:[#allocation5 + $0x288] sm:$0xff]
    %v186 = vld [vmem:[#allocation5 + $0x290] sm:$0xff]
    %v187 = vld [vmem:[#allocation5 + $0x298] sm:$0xff]
    %v188 = vld [vmem:[#allocation5 + $0x2a0] sm:$0xff]
    %v189 = vld [vmem:[#allocation5 + $0x2a8] sm:$0xff]
    %v190 = vld [vmem:[#allocation5 + $0x2b0] sm:$0xff]
    %v191 = vld [vmem:[#allocation5 + $0x2b8] sm:$0xff]
    %v192 = vld [vmem:[#allocation5 + $0x2c0] sm:$0xff]
    %v193 = vld [vmem:[#allocation5 + $0x2c8] sm:$0xff]
    %v194 = vld [vmem:[#allocation5 + $0x2d0] sm:$0xff]
    %v195 = vld [vmem:[#allocation5 + $0x2d8] sm:$0xff]
    %v196 = vld [vmem:[#allocation5 + $0x2e0] sm:$0xff]
    %v197 = vld [vmem:[#allocation5 + $0x2e8] sm:$0xff]
    %v198 = vld [vmem:[#allocation5 + $0x2f0] sm:$0xff]
    %v199 = vld [vmem:[#allocation5 + $0x2f8] sm:$0xff]
    %v200 = vld [vmem:[#allocation5 + $0x300] sm:$0xff]
    %v201 = vld [vmem:[#allocation5 + $0x308] sm:$0xff]
    %v202 = vld [vmem:[#allocation7] sm:$0xf]
    %v204 = vlaneseq
    %v205 = vshrl.u32 %v204, 7
    %v206 = vsub.s32 0, %v205
    %v207 = vrot.slane %v202, %v206
    %v208 = vlaneseq
    %v209 = vshrl.u32 %v208, 7
    %v210 = vsub.s32 1, %v209
    %v211 = vrot.slane %v202, %v210
    %v212 = vlaneseq
    %v213 = vshrl.u32 %v212, 7
    %v214 = vsub.s32 2, %v213
    %v215 = vrot.slane %v202, %v214
    %v216 = vlaneseq
    %v217 = vshrl.u32 %v216, 7
    %v218 = vsub.s32 3, %v217
    %v219 = vrot.slane %v202, %v218
    %v322 = vunpack.c.l.b16 %v104
    %v323 = vunpack.c.h.b16 %v104
    %v324 = vunpack.c.l.b16 %v105
    %v325 = vunpack.c.h.b16 %v105
    %v326 = vunpack.c.l.b16 %v106
    %v327 = vunpack.c.h.b16 %v106
    %v328 = vunpack.c.l.b16 %v107
    %v329 = vunpack.c.h.b16 %v107
    %v330 = vunpack.c.l.b16 %v108
    %v331 = vunpack.c.h.b16 %v108
    %v332 = vunpack.c.l.b16 %v109
    %v333 = vunpack.c.h.b16 %v109
    %v334 = vunpack.c.l.b16 %v110
    %v335 = vunpack.c.h.b16 %v110
    %v336 = vunpack.c.l.b16 %v111
    %v337 = vunpack.c.h.b16 %v111
    %v338 = vunpack.c.l.b16 %v112
    %v339 = vunpack.c.h.b16 %v112
    %v340 = vunpack.c.l.b16 %v113
    %v341 = vunpack.c.h.b16 %v113
    %v342 = vunpack.c.l.b16 %v114
    %v343 = vunpack.c.h.b16 %v114
    %v344 = vunpack.c.l.b16 %v115
    %v345 = vunpack.c.h.b16 %v115
    %v346 = vunpack.c.l.b16 %v116
    %v347 = vunpack.c.h.b16 %v116
    %v348 = vunpack.c.l.b16 %v117
    %v349 = vunpack.c.h.b16 %v117
    %v350 = vunpack.c.l.b16 %v118
    %v351 = vunpack.c.h.b16 %v118
    %v352 = vunpack.c.l.b16 %v119
    %v353 = vunpack.c.h.b16 %v119
    %v354 = vunpack.c.l.b16 %v120
    %v355 = vunpack.c.h.b16 %v120
    %v356 = vunpack.c.l.b16 %v121
    %v357 = vunpack.c.h.b16 %v121
    %v358 = vunpack.c.l.b16 %v122
    %v359 = vunpack.c.h.b16 %v122
    %v360 = vunpack.c.l.b16 %v123
    %v361 = vunpack.c.h.b16 %v123
    %v362 = vunpack.c.l.b16 %v124
    %v363 = vunpack.c.h.b16 %v124
    %v364 = vunpack.c.l.b16 %v125
    %v365 = vunpack.c.h.b16 %v125
    %v366 = vunpack.c.l.b16 %v126
    %v367 = vunpack.c.h.b16 %v126
    %v368 = vunpack.c.l.b16 %v127
    %v369 = vunpack.c.h.b16 %v127
    %v370 = vunpack.c.l.b16 %v128
    %v371 = vunpack.c.h.b16 %v128
    %v372 = vunpack.c.l.b16 %v129
    %v373 = vunpack.c.h.b16 %v129
    %v374 = vunpack.c.l.b16 %v130
    %v375 = vunpack.c.h.b16 %v130
    %v376 = vunpack.c.l.b16 %v131
    %v377 = vunpack.c.h.b16 %v131
    %v378 = vunpack.c.l.b16 %v132
    %v379 = vunpack.c.h.b16 %v132
    %v380 = vunpack.c.l.b16 %v133
    %v381 = vunpack.c.h.b16 %v133
    %v382 = vunpack.c.l.b16 %v134
    %v383 = vunpack.c.h.b16 %v134
    %v384 = vunpack.c.l.b16 %v135
    %v385 = vunpack.c.h.b16 %v135
    %v386 = vunpack.c.l.b16 %v136
    %v387 = vunpack.c.h.b16 %v136
    %v388 = vunpack.c.l.b16 %v137
    %v389 = vunpack.c.h.b16 %v137
    %v390 = vunpack.c.l.b16 %v138
    %v391 = vunpack.c.h.b16 %v138
    %v392 = vunpack.c.l.b16 %v139
    %v393 = vunpack.c.h.b16 %v139
    %v394 = vunpack.c.l.b16 %v140
    %v395 = vunpack.c.h.b16 %v140
    %v396 = vunpack.c.l.b16 %v141
    %v397 = vunpack.c.h.b16 %v141
    %v398 = vunpack.c.l.b16 %v142
    %v399 = vunpack.c.h.b16 %v142
    %v400 = vunpack.c.l.b16 %v143
    %v401 = vunpack.c.h.b16 %v143
    %v402 = vunpack.c.l.b16 %v144
    %v403 = vunpack.c.h.b16 %v144
    %v404 = vunpack.c.l.b16 %v145
    %v405 = vunpack.c.h.b16 %v145
    %v406 = vunpack.c.l.b16 %v146
    %v407 = vunpack.c.h.b16 %v146
    %v408 = vunpack.c.l.b16 %v147
    %v409 = vunpack.c.h.b16 %v147
    %v410 = vunpack.c.l.b16 %v148
    %v411 = vunpack.c.h.b16 %v148
    %v412 = vunpack.c.l.b16 %v149
    %v413 = vunpack.c.h.b16 %v149
    %v414 = vunpack.c.l.b16 %v150
    %v415 = vunpack.c.h.b16 %v150
    %v416 = vunpack.c.l.b16 %v151
    %v417 = vunpack.c.h.b16 %v151
    %v418 = vunpack.c.l.b16 %v152
    %v419 = vunpack.c.h.b16 %v152
    %v420 = vunpack.c.l.b16 %v153
    %v421 = vunpack.c.h.b16 %v153
    %v422 = vunpack.c.l.b16 %v154
    %v423 = vunpack.c.h.b16 %v154
    %v424 = vunpack.c.l.b16 %v155
    %v425 = vunpack.c.h.b16 %v155
    %v426 = vunpack.c.l.b16 %v156
    %v427 = vunpack.c.h.b16 %v156
    %v428 = vunpack.c.l.b16 %v157
    %v429 = vunpack.c.h.b16 %v157
    %v430 = vunpack.c.l.b16 %v158
    %v431 = vunpack.c.h.b16 %v158
    %v432 = vunpack.c.l.b16 %v159
    %v433 = vunpack.c.h.b16 %v159
    %v434 = vunpack.c.l.b16 %v160
    %v435 = vunpack.c.h.b16 %v160
    %v436 = vunpack.c.l.b16 %v161
    %v437 = vunpack.c.h.b16 %v161
    %v438 = vunpack.c.l.b16 %v162
    %v439 = vunpack.c.h.b16 %v162
    %v440 = vunpack.c.l.b16 %v163
    %v441 = vunpack.c.h.b16 %v163
    %v442 = vunpack.c.l.b16 %v164
    %v443 = vunpack.c.h.b16 %v164
    %v444 = vunpack.c.l.b16 %v165
    %v445 = vunpack.c.h.b16 %v165
    %v446 = vunpack.c.l.b16 %v166
    %v447 = vunpack.c.h.b16 %v166
    %v448 = vunpack.c.l.b16 %v167
    %v449 = vunpack.c.h.b16 %v167
    %v450 = vunpack.c.l.b16 %v168
    %v451 = vunpack.c.h.b16 %v168
    %v452 = vunpack.c.l.b16 %v169
    %v453 = vunpack.c.h.b16 %v169
    %v454 = vunpack.c.l.b16 %v170
    %v455 = vunpack.c.h.b16 %v170
    %v456 = vunpack.c.l.b16 %v171
    %v457 = vunpack.c.h.b16 %v171
    %v458 = vunpack.c.l.b16 %v172
    %v459 = vunpack.c.h.b16 %v172
    %v460 = vunpack.c.l.b16 %v173
    %v461 = vunpack.c.h.b16 %v173
    %v462 = vunpack.c.l.b16 %v174
    %v463 = vunpack.c.h.b16 %v174
    %v464 = vunpack.c.l.b16 %v175
    %v465 = vunpack.c.h.b16 %v175
    %v466 = vunpack.c.l.b16 %v176
    %v467 = vunpack.c.h.b16 %v176
    %v468 = vunpack.c.l.b16 %v177
    %v469 = vunpack.c.h.b16 %v177
    %v470 = vunpack.c.l.b16 %v178
    %v471 = vunpack.c.h.b16 %v178
    %v472 = vunpack.c.l.b16 %v179
    %v473 = vunpack.c.h.b16 %v179
    %v474 = vunpack.c.l.b16 %v180
    %v475 = vunpack.c.h.b16 %v180
    %v476 = vunpack.c.l.b16 %v181
    %v477 = vunpack.c.h.b16 %v181
    %v478 = vunpack.c.l.b16 %v182
    %v479 = vunpack.c.h.b16 %v182
    %v480 = vunpack.c.l.b16 %v183
    %v481 = vunpack.c.h.b16 %v183
    %v482 = vunpack.c.l.b16 %v184
    %v483 = vunpack.c.h.b16 %v184
    %v484 = vunpack.c.l.b16 %v185
    %v485 = vunpack.c.h.b16 %v185
    %v486 = vunpack.c.l.b16 %v186
    %v487 = vunpack.c.h.b16 %v186
    %v488 = vunpack.c.l.b16 %v187
    %v489 = vunpack.c.h.b16 %v187
    %v490 = vunpack.c.l.b16 %v188
    %v491 = vunpack.c.h.b16 %v188
    %v492 = vunpack.c.l.b16 %v189
    %v493 = vunpack.c.h.b16 %v189
    %v494 = vunpack.c.l.b16 %v190
    %v495 = vunpack.c.h.b16 %v190
    %v496 = vunpack.c.l.b16 %v191
    %v497 = vunpack.c.h.b16 %v191
    %v498 = vunpack.c.l.b16 %v192
    %v499 = vunpack.c.h.b16 %v192
    %v500 = vunpack.c.l.b16 %v193
    %v501 = vunpack.c.h.b16 %v193
    %v502 = vunpack.c.l.b16 %v194
    %v503 = vunpack.c.h.b16 %v194
    %v504 = vunpack.c.l.b16 %v195
    %v505 = vunpack.c.h.b16 %v195
    %v506 = vunpack.c.l.b16 %v196
    %v507 = vunpack.c.h.b16 %v196
    %v508 = vunpack.c.l.b16 %v197
    %v509 = vunpack.c.h.b16 %v197
    %v510 = vunpack.c.l.b16 %v198
    %v511 = vunpack.c.h.b16 %v198
    %v512 = vunpack.c.l.b16 %v199
    %v513 = vunpack.c.h.b16 %v199
    %v514 = vunpack.c.l.b16 %v200
    %v515 = vunpack.c.h.b16 %v200
    %v516 = vunpack.c.l.b16 %v201
    %v517 = vunpack.c.h.b16 %v201
    %v518 = vpack.c.b16 %v326, %v322
    %v519 = vpack.c.b16 %v327, %v323
    %v520 = vpack.c.b16 %v328, %v324
    %v521 = vpack.c.b16 %v329, %v325
    %v522 = vpack.c.b16 %v334, %v330
    %v523 = vpack.c.b16 %v335, %v331
    %v524 = vpack.c.b16 %v336, %v332
    %v525 = vpack.c.b16 %v337, %v333
    %v526 = vpack.c.b16 %v342, %v338
    %v527 = vpack.c.b16 %v343, %v339
    %v528 = vpack.c.b16 %v344, %v340
    %v529 = vpack.c.b16 %v345, %v341
    %v530 = vpack.c.b16 %v350, %v346
    %v531 = vpack.c.b16 %v351, %v347
    %v532 = vpack.c.b16 %v352, %v348
    %v533 = vpack.c.b16 %v353, %v349
    %v534 = vpack.c.b16 %v358, %v354
    %v535 = vpack.c.b16 %v359, %v355
    %v536 = vpack.c.b16 %v360, %v356
    %v537 = vpack.c.b16 %v361, %v357
    %v538 = vpack.c.b16 %v366, %v362
    %v539 = vpack.c.b16 %v367, %v363
    %v540 = vpack.c.b16 %v368, %v364
    %v541 = vpack.c.b16 %v369, %v365
    %v542 = vpack.c.b16 %v374, %v370
    %v543 = vpack.c.b16 %v375, %v371
    %v544 = vpack.c.b16 %v376, %v372
    %v545 = vpack.c.b16 %v377, %v373
    %v546 = vpack.c.b16 %v382, %v378
    %v547 = vpack.c.b16 %v383, %v379
    %v548 = vpack.c.b16 %v384, %v380
    %v549 = vpack.c.b16 %v385, %v381
    %v550 = vpack.c.b16 %v390, %v386
    %v551 = vpack.c.b16 %v391, %v387
    %v552 = vpack.c.b16 %v392, %v388
    %v553 = vpack.c.b16 %v393, %v389
    %v554 = vpack.c.b16 %v398, %v394
    %v555 = vpack.c.b16 %v399, %v395
    %v556 = vpack.c.b16 %v400, %v396
    %v557 = vpack.c.b16 %v401, %v397
    %v558 = vpack.c.b16 %v406, %v402
    %v559 = vpack.c.b16 %v407, %v403
    %v560 = vpack.c.b16 %v408, %v404
    %v561 = vpack.c.b16 %v409, %v405
    %v562 = vpack.c.b16 %v414, %v410
    %v563 = vpack.c.b16 %v415, %v411
    %v564 = vpack.c.b16 %v416, %v412
    %v565 = vpack.c.b16 %v417, %v413
    %v566 = vpack.c.b16 %v422, %v418
    %v567 = vpack.c.b16 %v423, %v419
    %v568 = vpack.c.b16 %v424, %v420
    %v569 = vpack.c.b16 %v425, %v421
    %v570 = vpack.c.b16 %v430, %v426
    %v571 = vpack.c.b16 %v431, %v427
    %v572 = vpack.c.b16 %v432, %v428
    %v573 = vpack.c.b16 %v433, %v429
    %v574 = vpack.c.b16 %v438, %v434
    %v575 = vpack.c.b16 %v439, %v435
    %v576 = vpack.c.b16 %v440, %v436
    %v577 = vpack.c.b16 %v441, %v437
    %v578 = vpack.c.b16 %v446, %v442
    %v579 = vpack.c.b16 %v447, %v443
    %v580 = vpack.c.b16 %v448, %v444
    %v581 = vpack.c.b16 %v449, %v445
    %v582 = vpack.c.b16 %v454, %v450
    %v583 = vpack.c.b16 %v455, %v451
    %v584 = vpack.c.b16 %v456, %v452
    %v585 = vpack.c.b16 %v457, %v453
    %v586 = vpack.c.b16 %v462, %v458
    %v587 = vpack.c.b16 %v463, %v459
    %v588 = vpack.c.b16 %v464, %v460
    %v589 = vpack.c.b16 %v465, %v461
    %v590 = vpack.c.b16 %v470, %v466
    %v591 = vpack.c.b16 %v471, %v467
    %v592 = vpack.c.b16 %v472, %v468
    %v593 = vpack.c.b16 %v473, %v469
    %v594 = vpack.c.b16 %v478, %v474
    %v595 = vpack.c.b16 %v479, %v475
    %v596 = vpack.c.b16 %v480, %v476
    %v597 = vpack.c.b16 %v481, %v477
    %v598 = vpack.c.b16 %v486, %v482
    %v599 = vpack.c.b16 %v487, %v483
    %v600 = vpack.c.b16 %v488, %v484
    %v601 = vpack.c.b16 %v489, %v485
    %v602 = vpack.c.b16 %v494, %v490
    %v603 = vpack.c.b16 %v495, %v491
    %v604 = vpack.c.b16 %v496, %v492
    %v605 = vpack.c.b16 %v497, %v493
    %v606 = vpack.c.b16 %v502, %v498
    %v607 = vpack.c.b16 %v503, %v499
    %v608 = vpack.c.b16 %v504, %v500
    %v609 = vpack.c.b16 %v505, %v501
    %v610 = vpack.c.b16 %v510, %v506
    %v611 = vpack.c.b16 %v511, %v507
    %v612 = vpack.c.b16 %v512, %v508
    %v613 = vpack.c.b16 %v513, %v509
    %v614 = vpack.c.b16 %v514, %v514
    %v615 = vpack.c.b16 %v515, %v515
    %v616 = vpack.c.b16 %v516, %v516
    %v617 = vpack.c.b16 %v517, %v517
    %vm714 = vcmask 64512
    %v716 = vsel %vm714, %v103, 0
    %vm718 = vcmask 1043456
    %v720 = vsel %vm718, %v614, 0
    %v723 = vsel %vm718, %v615, 0
    %v726 = vsel %vm718, %v616, 0
    %v729 = vsel %vm718, %v617, 0
    %731 = vmatprep.subr.bf16.mxu0 %v547
    %732 = vmatpush1.bf16.msra.mxu0 %v546
    %733 = vmatprep.subr.bf16.mxu0 %v543
    %734 = vmatpush1.bf16.msra.mxu0 %v542
    %735 = vmatprep.subr.bf16.mxu0 %v539
    %736 = vmatpush1.bf16.msra.mxu0 %v538
    %737 = vmatprep.subr.bf16.mxu0 %v535
    %738 = vmatpush1.bf16.msra.mxu0 %v534
    %739 = vmatprep.subr.bf16.mxu0 %v531
    %740 = vmatpush1.bf16.msra.mxu0 %v530
    %741 = vmatprep.subr.bf16.mxu0 %v527
    %742 = vmatpush1.bf16.msra.mxu0 %v526
    %743 = vmatprep.subr.bf16.mxu0 %v523
    %744 = vmatpush1.bf16.msra.mxu0 %v522
    %745 = vmatprep.subr.bf16.mxu0 %v519
    %746 = vmatpush1.bf16.msra.mxu0 %v518
    %747 = vmatprep.subr.bf16.mxu0 %v579
    %748 = vmatpush2.bf16.msra.mxu0 %v578
    %749 = vmatprep.subr.bf16.mxu0 %v575
    %750 = vmatpush2.bf16.msra.mxu0 %v574
    %751 = vmatprep.subr.bf16.mxu0 %v571
    %752 = vmatpush2.bf16.msra.mxu0 %v570
    %753 = vmatprep.subr.bf16.mxu0 %v567
    %754 = vmatpush2.bf16.msra.mxu0 %v566
    %755 = vmatprep.subr.bf16.mxu0 %v563
    %756 = vmatpush2.bf16.msra.mxu0 %v562
    %757 = vmatprep.subr.bf16.mxu0 %v559
    %758 = vmatpush2.bf16.msra.mxu0 %v558
    %759 = vmatprep.subr.bf16.mxu0 %v555
    %760 = vmatpush2.bf16.msra.mxu0 %v554
    %761 = vmatprep.subr.bf16.mxu0 %v551
    %762 = vmatpush2.bf16.msra.mxu0 %v550
    %763 = vmatprep.mubr.bf16.mxu0 %v101
    %764 = vmatmul.mubr.bf16.gmra.mxu0 %v100
    %v765 = vpop.f32.mrf.mxu0
    %v766 = vadd.f32 %v207, %v765
    %v767 = vpop.f32.mrf.mxu0
    %v768 = vadd.f32 %v211, %v767
    %v769 = vpop.f32.mrf.mxu0
    %v770 = vpop.f32.mrf.mxu0
    %771 = vdwg.mxu0
    %772 = vmatprep.subr.bf16.mxu0 %v611
    %773 = vmatpush1.bf16.msra.mxu0 %v610
    %774 = vmatprep.subr.bf16.mxu0 %v607
    %775 = vmatpush1.bf16.msra.mxu0 %v606
    %776 = vmatprep.subr.bf16.mxu0 %v603
    %777 = vmatpush1.bf16.msra.mxu0 %v602
    %778 = vmatprep.subr.bf16.mxu0 %v599
    %779 = vmatpush1.bf16.msra.mxu0 %v598
    %780 = vmatprep.subr.bf16.mxu0 %v595
    %781 = vmatpush1.bf16.msra.mxu0 %v594
    %782 = vmatprep.subr.bf16.mxu0 %v591
    %783 = vmatpush1.bf16.msra.mxu0 %v590
    %784 = vmatprep.subr.bf16.mxu0 %v587
    %785 = vmatpush1.bf16.msra.mxu0 %v586
    %786 = vmatprep.subr.bf16.mxu0 %v583
    %787 = vmatpush1.bf16.msra.mxu0 %v582
    %788 = vmatprep.subr.bf16.mxu0 0
    %789 = vmatpush2.bf16.msra.mxu0 0
    %790 = vmatprep.subr.bf16.mxu0 0
    %791 = vmatpush2.bf16.msra.mxu0 0
    %792 = vmatprep.subr.bf16.mxu0 0
    %793 = vmatpush2.bf16.msra.mxu0 0
    %794 = vmatprep.subr.bf16.mxu0 0
    %795 = vmatpush2.bf16.msra.mxu0 0
    %796 = vmatprep.subr.bf16.mxu0 0
    %797 = vmatpush2.bf16.msra.mxu0 0
    %798 = vmatprep.subr.bf16.mxu0 0
    %799 = vmatpush2.bf16.msra.mxu0 0
    %800 = vmatprep.subr.bf16.mxu0 0
    %801 = vmatpush2.bf16.msra.mxu0 0
    %802 = vmatprep.subr.bf16.mxu0 %v723
    %803 = vmatpush2.bf16.msra.mxu0 %v720
    %804 = vmatprep.mubr.bf16.mxu0 %v716
    %805 = vmatmul.mubr.bf16.gmra.mxu0 %v102
    %v806 = vpop.f32.mrf.mxu0
    %v807 = vadd.f32 %v766, %v806
    %v808 = vpop.f32.mrf.mxu0
    %v809 = vadd.f32 %v768, %v808
    %v810 = vpop.f32.mrf.mxu0
    %v811 = vpop.f32.mrf.mxu0
    %812 = vdwg.mxu0
    %813 = vmatprep.subr.bf16.mxu0 %v549
    %814 = vmatpush1.bf16.msra.mxu0 %v548
    %815 = vmatprep.subr.bf16.mxu0 %v545
    %816 = vmatpush1.bf16.msra.mxu0 %v544
    %817 = vmatprep.subr.bf16.mxu0 %v541
    %818 = vmatpush1.bf16.msra.mxu0 %v540
    %819 = vmatprep.subr.bf16.mxu0 %v537
    %820 = vmatpush1.bf16.msra.mxu0 %v536
    %821 = vmatprep.subr.bf16.mxu0 %v533
    %822 = vmatpush1.bf16.msra.mxu0 %v532
    %823 = vmatprep.subr.bf16.mxu0 %v529
    %824 = vmatpush1.bf16.msra.mxu0 %v528
    %825 = vmatprep.subr.bf16.mxu0 %v525
    %826 = vmatpush1.bf16.msra.mxu0 %v524
    %827 = vmatprep.subr.bf16.mxu0 %v521
    %828 = vmatpush1.bf16.msra.mxu0 %v520
    %829 = vmatprep.subr.bf16.mxu0 %v581
    %830 = vmatpush2.bf16.msra.mxu0 %v580
    %831 = vmatprep.subr.bf16.mxu0 %v577
    %832 = vmatpush2.bf16.msra.mxu0 %v576
    %833 = vmatprep.subr.bf16.mxu0 %v573
    %834 = vmatpush2.bf16.msra.mxu0 %v572
    %835 = vmatprep.subr.bf16.mxu0 %v569
    %836 = vmatpush2.bf16.msra.mxu0 %v568
    %837 = vmatprep.subr.bf16.mxu0 %v565
    %838 = vmatpush2.bf16.msra.mxu0 %v564
    %839 = vmatprep.subr.bf16.mxu0 %v561
    %840 = vmatpush2.bf16.msra.mxu0 %v560
    %841 = vmatprep.subr.bf16.mxu0 %v557
    %842 = vmatpush2.bf16.msra.mxu0 %v556
    %843 = vmatprep.subr.bf16.mxu0 %v553
    %844 = vmatpush2.bf16.msra.mxu0 %v552
    %845 = vmatprep.mubr.bf16.mxu0 %v101
    %846 = vmatmul.mubr.bf16.gmra.mxu0 %v100
    %v847 = vpop.f32.mrf.mxu0
    %v848 = vadd.f32 %v215, %v847
    %v849 = vpop.f32.mrf.mxu0
    %v850 = vadd.f32 %v219, %v849
    %v851 = vpop.f32.mrf.mxu0
    %v852 = vpop.f32.mrf.mxu0
    %853 = vdwg.mxu0
    %854 = vmatprep.subr.bf16.mxu0 %v613
    %855 = vmatpush1.bf16.msra.mxu0 %v612
    %856 = vmatprep.subr.bf16.mxu0 %v609
    %857 = vmatpush1.bf16.msra.mxu0 %v608
    %858 = vmatprep.subr.bf16.mxu0 %v605
    %859 = vmatpush1.bf16.msra.mxu0 %v604
    %860 = vmatprep.subr.bf16.mxu0 %v601
    %861 = vmatpush1.bf16.msra.mxu0 %v600
    %862 = vmatprep.subr.bf16.mxu0 %v597
    %863 = vmatpush1.bf16.msra.mxu0 %v596
    %864 = vmatprep.subr.bf16.mxu0 %v593
    %865 = vmatpush1.bf16.msra.mxu0 %v592
    %866 = vmatprep.subr.bf16.mxu0 %v589
    %867 = vmatpush1.bf16.msra.mxu0 %v588
    %868 = vmatprep.subr.bf16.mxu0 %v585
    %869 = vmatpush1.bf16.msra.mxu0 %v584
    %870 = vmatprep.subr.bf16.mxu0 0
    %871 = vmatpush2.bf16.msra.mxu0 0
    %872 = vmatprep.subr.bf16.mxu0 0
    %873 = vmatpush2.bf16.msra.mxu0 0
    %874 = vmatprep.subr.bf16.mxu0 0
    %875 = vmatpush2.bf16.msra.mxu0 0
    %876 = vmatprep.subr.bf16.mxu0 0
    %877 = vmatpush2.bf16.msra.mxu0 0
    %878 = vmatprep.subr.bf16.mxu0 0
    %879 = vmatpush2.bf16.msra.mxu0 0
    %880 = vmatprep.subr.bf16.mxu0 0
    %881 = vmatpush2.bf16.msra.mxu0 0
    %882 = vmatprep.subr.bf16.mxu0 0
    %883 = vmatpush2.bf16.msra.mxu0 0
    %884 = vmatprep.subr.bf16.mxu0 %v729
    %885 = vmatpush2.bf16.msra.mxu0 %v726
    %886 = vmatprep.mubr.bf16.mxu0 %v716
    %887 = vmatmul.mubr.bf16.gmra.mxu0 %v102
    %v888 = vpop.f32.mrf.mxu0
    %v889 = vadd.f32 %v848, %v888
    %v890 = vpop.f32.mrf.mxu0
    %v891 = vadd.f32 %v850, %v890
    %v892 = vpop.f32.mrf.mxu0
    %v893 = vpop.f32.mrf.mxu0
    %894 = vdwg.mxu0
    %v895 = vmax.f32 %v807, 0.0
    %v896 = vmax.f32 %v809, 0.0
    %v897 = vmax.f32 %v889, 0.0
    %v898 = vmax.f32 %v891, 0.0
    %v899 = vpack.c.bf16 %v895, %v895
    %v900 = vpack.c.bf16 %v896, %v896
    %v901 = vpack.c.bf16 %v897, %v897
    %v902 = vpack.c.bf16 %v898, %v898
    %v903 = vld [vmem:[#allocation8] sm:$0xff]
    %v904 = vld [vmem:[#allocation8 + $0x8] sm:$0xff]
    %v905 = vld [vmem:[#allocation8 + $0x10] sm:$0xff]
    %v906 = vld [vmem:[#allocation8 + $0x18] sm:$0xff]
    %v907 = vld [vmem:[#allocation8 + $0x20] sm:$0xff]
    %v908 = vld [vmem:[#allocation8 + $0x28] sm:$0xff]
    %v909 = vld [vmem:[#allocation8 + $0x30] sm:$0xff]
    %v910 = vld [vmem:[#allocation8 + $0x38] sm:$0xff]
    %v911 = vld [vmem:[#allocation8 + $0x40] sm:$0xff]
    %v912 = vld [vmem:[#allocation8 + $0x48] sm:$0xff]
    %v913 = vld [vmem:[#allocation8 + $0x50] sm:$0xff]
    %v914 = vld [vmem:[#allocation8 + $0x58] sm:$0xff]
    %v915 = vld [vmem:[#allocation8 + $0x60] sm:$0xff]
    %v916 = vld [vmem:[#allocation8 + $0x68] sm:$0xff]
    %v917 = vld [vmem:[#allocation8 + $0x70] sm:$0xff]
    %v918 = vld [vmem:[#allocation8 + $0x78] sm:$0xff]
    %v919 = vld [vmem:[#allocation8 + $0x80] sm:$0xff]
    %v920 = vld [vmem:[#allocation8 + $0x88] sm:$0xff]
    %v921 = vld [vmem:[#allocation8 + $0x90] sm:$0xff]
    %v922 = vld [vmem:[#allocation8 + $0x98] sm:$0xff]
    %v923 = vld [vmem:[#allocation8 + $0xa0] sm:$0xff]
    %v924 = vld [vmem:[#allocation8 + $0xa8] sm:$0xff]
    %v925 = vld [vmem:[#allocation8 + $0xb0] sm:$0xff]
    %v926 = vld [vmem:[#allocation8 + $0xb8] sm:$0xff]
    %v927 = vld [vmem:[#allocation8 + $0xc0] sm:$0xff]
    %v928 = vld [vmem:[#allocation8 + $0xc8] sm:$0xff]
    %v929 = vld [vmem:[#allocation8 + $0xd0] sm:$0xff]
    %v930 = vld [vmem:[#allocation8 + $0xd8] sm:$0xff]
    %v931 = vld [vmem:[#allocation8 + $0xe0] sm:$0xff]
    %v932 = vld [vmem:[#allocation8 + $0xe8] sm:$0xff]
    %v933 = vld [vmem:[#allocation8 + $0xf0] sm:$0xff]
    %v934 = vld [vmem:[#allocation8 + $0xf8] sm:$0xff]
    %v935 = vld [vmem:[#allocation8 + $0x100] sm:$0xff]
    %v936 = vld [vmem:[#allocation8 + $0x108] sm:$0xff]
    %v937 = vld [vmem:[#allocation8 + $0x110] sm:$0xff]
    %v938 = vld [vmem:[#allocation8 + $0x118] sm:$0xff]
    %v939 = vld [vmem:[#allocation8 + $0x120] sm:$0xff]
    %v940 = vld [vmem:[#allocation8 + $0x128] sm:$0xff]
    %v941 = vld [vmem:[#allocation8 + $0x130] sm:$0xff]
    %v942 = vld [vmem:[#allocation8 + $0x138] sm:$0xff]
    %v943 = vld [vmem:[#allocation8 + $0x140] sm:$0xff]
    %v944 = vld [vmem:[#allocation8 + $0x148] sm:$0xff]
    %v945 = vld [vmem:[#allocation8 + $0x150] sm:$0xff]
    %v946 = vld [vmem:[#allocation8 + $0x158] sm:$0xff]
    %v947 = vld [vmem:[#allocation8 + $0x160] sm:$0xff]
    %v948 = vld [vmem:[#allocation8 + $0x168] sm:$0xff]
    %v949 = vld [vmem:[#allocation8 + $0x170] sm:$0xff]
    %v950 = vld [vmem:[#allocation8 + $0x178] sm:$0xff]
    %v951 = vld [vmem:[#allocation8 + $0x180] sm:$0xff]
    %v952 = vld [vmem:[#allocation8 + $0x188] sm:$0xff]
    %v953 = vld [vmem:[#allocation8 + $0x190] sm:$0xff]
    %v954 = vld [vmem:[#allocation8 + $0x198] sm:$0xff]
    %v955 = vld [vmem:[#allocation8 + $0x1a0] sm:$0xff]
    %v956 = vld [vmem:[#allocation8 + $0x1a8] sm:$0xff]
    %v957 = vld [vmem:[#allocation8 + $0x1b0] sm:$0xff]
    %v958 = vld [vmem:[#allocation8 + $0x1b8] sm:$0xff]
    %v959 = vld [vmem:[#allocation8 + $0x1c0] sm:$0xff]
    %v960 = vld [vmem:[#allocation8 + $0x1c8] sm:$0xff]
    %v961 = vld [vmem:[#allocation8 + $0x1d0] sm:$0xff]
    %v962 = vld [vmem:[#allocation8 + $0x1d8] sm:$0xff]
    %v963 = vld [vmem:[#allocation8 + $0x1e0] sm:$0xff]
    %v964 = vld [vmem:[#allocation8 + $0x1e8] sm:$0xff]
    %v965 = vld [vmem:[#allocation8 + $0x1f0] sm:$0xff]
    %v966 = vld [vmem:[#allocation8 + $0x1f8] sm:$0xff]
    %v967 = vld [vmem:[#allocation8 + $0x200] sm:$0xff]
    %v968 = vld [vmem:[#allocation8 + $0x208] sm:$0xff]
    %v969 = vld [vmem:[#allocation8 + $0x210] sm:$0xff]
    %v970 = vld [vmem:[#allocation8 + $0x218] sm:$0xff]
    %v971 = vld [vmem:[#allocation8 + $0x220] sm:$0xff]
    %v972 = vld [vmem:[#allocation8 + $0x228] sm:$0xff]
    %v973 = vld [vmem:[#allocation8 + $0x230] sm:$0xff]
    %v974 = vld [vmem:[#allocation8 + $0x238] sm:$0xff]
    %v975 = vld [vmem:[#allocation8 + $0x240] sm:$0xff]
    %v976 = vld [vmem:[#allocation8 + $0x248] sm:$0xff]
    %v977 = vld [vmem:[#allocation8 + $0x250] sm:$0xff]
    %v978 = vld [vmem:[#allocation8 + $0x258] sm:$0xff]
    %v979 = vld [vmem:[#allocation8 + $0x260] sm:$0xff]
    %v980 = vld [vmem:[#allocation8 + $0x268] sm:$0xff]
    %v981 = vld [vmem:[#allocation8 + $0x270] sm:$0xff]
    %v982 = vld [vmem:[#allocation8 + $0x278] sm:$0xff]
    %v983 = vld [vmem:[#allocation8 + $0x280] sm:$0xff]
    %v984 = vld [vmem:[#allocation8 + $0x288] sm:$0xff]
    %v985 = vld [vmem:[#allocation8 + $0x290] sm:$0xff]
    %v986 = vld [vmem:[#allocation8 + $0x298] sm:$0xff]
    %v987 = vld [vmem:[#allocation8 + $0x2a0] sm:$0xff]
    %v988 = vld [vmem:[#allocation8 + $0x2a8] sm:$0xff]
    %v989 = vld [vmem:[#allocation8 + $0x2b0] sm:$0xff]
    %v990 = vld [vmem:[#allocation8 + $0x2b8] sm:$0xff]
    %v991 = vld [vmem:[#allocation8 + $0x2c0] sm:$0xff]
    %v992 = vld [vmem:[#allocation8 + $0x2c8] sm:$0xff]
    %v993 = vld [vmem:[#allocation8 + $0x2d0] sm:$0xff]
    %v994 = vld [vmem:[#allocation8 + $0x2d8] sm:$0xff]
    %v995 = vld [vmem:[#allocation8 + $0x2e0] sm:$0xff]
    %v996 = vld [vmem:[#allocation8 + $0x2e8] sm:$0xff]
    %v997 = vld [vmem:[#allocation8 + $0x2f0] sm:$0xff]
    %v998 = vld [vmem:[#allocation8 + $0x2f8] sm:$0xff]
    %v999 = vld [vmem:[#allocation8 + $0x300] sm:$0xff]
    %v1000 = vld [vmem:[#allocation8 + $0x308] sm:$0xff]
    %v1001 = vld [vmem:[#allocation8 + $0x310] sm:$0xff]
    %v1002 = vld [vmem:[#allocation8 + $0x318] sm:$0xff]
    %v1003 = vld [vmem:[#allocation8 + $0x320] sm:$0xff]
    %v1004 = vld [vmem:[#allocation8 + $0x328] sm:$0xff]
    %v1005 = vld [vmem:[#allocation8 + $0x330] sm:$0xff]
    %v1006 = vld [vmem:[#allocation8 + $0x338] sm:$0xff]
    %v1007 = vld [vmem:[#allocation8 + $0x340] sm:$0xff]
    %v1008 = vld [vmem:[#allocation8 + $0x348] sm:$0xff]
    %v1009 = vld [vmem:[#allocation8 + $0x350] sm:$0xff]
    %v1010 = vld [vmem:[#allocation8 + $0x358] sm:$0xff]
    %v1011 = vld [vmem:[#allocation8 + $0x360] sm:$0xff]
    %v1012 = vld [vmem:[#allocation8 + $0x368] sm:$0xff]
    %v1013 = vld [vmem:[#allocation8 + $0x370] sm:$0xff]
    %v1014 = vld [vmem:[#allocation8 + $0x378] sm:$0xff]
    %v1015 = vld [vmem:[#allocation8 + $0x380] sm:$0xff]
    %v1016 = vld [vmem:[#allocation8 + $0x388] sm:$0xff]
    %v1017 = vld [vmem:[#allocation8 + $0x390] sm:$0xff]
    %v1018 = vld [vmem:[#allocation8 + $0x398] sm:$0xff]
    %v1019 = vld [vmem:[#allocation8 + $0x3a0] sm:$0xff]
    %v1020 = vld [vmem:[#allocation8 + $0x3a8] sm:$0xff]
    %v1021 = vld [vmem:[#allocation8 + $0x3b0] sm:$0xff]
    %v1022 = vld [vmem:[#allocation8 + $0x3b8] sm:$0xff]
    %v1023 = vld [vmem:[#allocation8 + $0x3c0] sm:$0xff]
    %v1024 = vld [vmem:[#allocation8 + $0x3c8] sm:$0xff]
    %v1025 = vld [vmem:[#allocation8 + $0x3d0] sm:$0xff]
    %v1026 = vld [vmem:[#allocation8 + $0x3d8] sm:$0xff]
    %v1027 = vld [vmem:[#allocation8 + $0x3e0] sm:$0xff]
    %v1028 = vld [vmem:[#allocation8 + $0x3e8] sm:$0xff]
    %v1029 = vld [vmem:[#allocation8 + $0x3f0] sm:$0xff]
    %v1030 = vld [vmem:[#allocation8 + $0x3f8] sm:$0xff]
    %v1031 = vld [vmem:[#allocation8 + $0x400] sm:$0xff]
    %v1032 = vld [vmem:[#allocation8 + $0x408] sm:$0xff]
    %v1033 = vld [vmem:[#allocation8 + $0x410] sm:$0xff]
    %v1034 = vld [vmem:[#allocation8 + $0x418] sm:$0xff]
    %v1035 = vld [vmem:[#allocation8 + $0x420] sm:$0xff]
    %v1036 = vld [vmem:[#allocation8 + $0x428] sm:$0xff]
    %v1037 = vld [vmem:[#allocation8 + $0x430] sm:$0xff]
    %v1038 = vld [vmem:[#allocation8 + $0x438] sm:$0xff]
    %v1039 = vld [vmem:[#allocation8 + $0x440] sm:$0xff]
    %v1040 = vld [vmem:[#allocation8 + $0x448] sm:$0xff]
    %v1041 = vld [vmem:[#allocation8 + $0x450] sm:$0xff]
    %v1042 = vld [vmem:[#allocation8 + $0x458] sm:$0xff]
    %v1043 = vld [vmem:[#allocation8 + $0x460] sm:$0xff]
    %v1044 = vld [vmem:[#allocation8 + $0x468] sm:$0xff]
    %v1045 = vld [vmem:[#allocation8 + $0x470] sm:$0xff]
    %v1046 = vld [vmem:[#allocation8 + $0x478] sm:$0xff]
    %v1047 = vld [vmem:[#allocation8 + $0x480] sm:$0xff]
    %v1048 = vld [vmem:[#allocation8 + $0x488] sm:$0xff]
    %v1049 = vld [vmem:[#allocation8 + $0x490] sm:$0xff]
    %v1050 = vld [vmem:[#allocation8 + $0x498] sm:$0xff]
    %v1051 = vld [vmem:[#allocation8 + $0x4a0] sm:$0xff]
    %v1052 = vld [vmem:[#allocation8 + $0x4a8] sm:$0xff]
    %v1053 = vld [vmem:[#allocation8 + $0x4b0] sm:$0xff]
    %v1054 = vld [vmem:[#allocation8 + $0x4b8] sm:$0xff]
    %v1055 = vld [vmem:[#allocation8 + $0x4c0] sm:$0xff]
    %v1056 = vld [vmem:[#allocation8 + $0x4c8] sm:$0xff]
    %v1057 = vld [vmem:[#allocation8 + $0x4d0] sm:$0xff]
    %v1058 = vld [vmem:[#allocation8 + $0x4d8] sm:$0xff]
    %v1059 = vld [vmem:[#allocation8 + $0x4e0] sm:$0xff]
    %v1060 = vld [vmem:[#allocation8 + $0x4e8] sm:$0xff]
    %v1061 = vld [vmem:[#allocation8 + $0x4f0] sm:$0xff]
    %v1062 = vld [vmem:[#allocation8 + $0x4f8] sm:$0xff]
    %v1063 = vld [vmem:[#allocation8 + $0x500] sm:$0xff]
    %v1064 = vld [vmem:[#allocation8 + $0x508] sm:$0xff]
    %v1065 = vld [vmem:[#allocation8 + $0x510] sm:$0xff]
    %v1066 = vld [vmem:[#allocation8 + $0x518] sm:$0xff]
    %v1067 = vld [vmem:[#allocation8 + $0x520] sm:$0xff]
    %v1068 = vld [vmem:[#allocation8 + $0x528] sm:$0xff]
    %v1069 = vld [vmem:[#allocation8 + $0x530] sm:$0xff]
    %v1070 = vld [vmem:[#allocation8 + $0x538] sm:$0xff]
    %v1071 = vld [vmem:[#allocation8 + $0x540] sm:$0xff]
    %v1072 = vld [vmem:[#allocation8 + $0x548] sm:$0xff]
    %v1073 = vld [vmem:[#allocation8 + $0x550] sm:$0xff]
    %v1074 = vld [vmem:[#allocation8 + $0x558] sm:$0xff]
    %v1075 = vld [vmem:[#allocation8 + $0x560] sm:$0xff]
    %v1076 = vld [vmem:[#allocation8 + $0x568] sm:$0xff]
    %v1077 = vld [vmem:[#allocation8 + $0x570] sm:$0xff]
    %v1078 = vld [vmem:[#allocation8 + $0x578] sm:$0xff]
    %v1079 = vld [vmem:[#allocation8 + $0x580] sm:$0xff]
    %v1080 = vld [vmem:[#allocation8 + $0x588] sm:$0xff]
    %v1081 = vld [vmem:[#allocation8 + $0x590] sm:$0xff]
    %v1082 = vld [vmem:[#allocation8 + $0x598] sm:$0xff]
    %v1083 = vld [vmem:[#allocation8 + $0x5a0] sm:$0xff]
    %v1084 = vld [vmem:[#allocation8 + $0x5a8] sm:$0xff]
    %v1085 = vld [vmem:[#allocation8 + $0x5b0] sm:$0xff]
    %v1086 = vld [vmem:[#allocation8 + $0x5b8] sm:$0xff]
    %v1087 = vld [vmem:[#allocation8 + $0x5c0] sm:$0xff]
    %v1088 = vld [vmem:[#allocation8 + $0x5c8] sm:$0xff]
    %v1089 = vld [vmem:[#allocation8 + $0x5d0] sm:$0xff]
    %v1090 = vld [vmem:[#allocation8 + $0x5d8] sm:$0xff]
    %v1091 = vld [vmem:[#allocation8 + $0x5e0] sm:$0xff]
    %v1092 = vld [vmem:[#allocation8 + $0x5e8] sm:$0xff]
    %v1093 = vld [vmem:[#allocation8 + $0x5f0] sm:$0xff]
    %v1094 = vld [vmem:[#allocation8 + $0x5f8] sm:$0xff]
    %v1095 = vld [vmem:[%s4] sm:$0x3f]
    %v1097 = vlaneseq
    %v1098 = vshrl.u32 %v1097, 7
    %v1099 = vsub.s32 0, %v1098
    %v1100 = vrot.slane %v1095, %v1099
    %v1101 = vlaneseq
    %v1102 = vshrl.u32 %v1101, 7
    %v1103 = vsub.s32 1, %v1102
    %v1104 = vrot.slane %v1095, %v1103
    %v1105 = vlaneseq
    %v1106 = vshrl.u32 %v1105, 7
    %v1107 = vsub.s32 2, %v1106
    %v1108 = vrot.slane %v1095, %v1107
    %v1109 = vlaneseq
    %v1110 = vshrl.u32 %v1109, 7
    %v1111 = vsub.s32 3, %v1110
    %v1112 = vrot.slane %v1095, %v1111
    %v1113 = vlaneseq
    %v1114 = vshrl.u32 %v1113, 7
    %v1115 = vsub.s32 4, %v1114
    %v1116 = vrot.slane %v1095, %v1115
    %v1117 = vlaneseq
    %v1118 = vshrl.u32 %v1117, 7
    %v1119 = vsub.s32 5, %v1118
    %v1120 = vrot.slane %v1095, %v1119
    %v1319 = vunpack.c.l.b16 %v903
    %v1320 = vunpack.c.h.b16 %v903
    %v1321 = vunpack.c.l.b16 %v904
    %v1322 = vunpack.c.h.b16 %v904
    %v1323 = vunpack.c.l.b16 %v905
    %v1324 = vunpack.c.h.b16 %v905
    %v1325 = vunpack.c.l.b16 %v906
    %v1326 = vunpack.c.h.b16 %v906
    %v1327 = vunpack.c.l.b16 %v907
    %v1328 = vunpack.c.h.b16 %v907
    %v1329 = vunpack.c.l.b16 %v908
    %v1330 = vunpack.c.h.b16 %v908
    %v1331 = vunpack.c.l.b16 %v909
    %v1332 = vunpack.c.h.b16 %v909
    %v1333 = vunpack.c.l.b16 %v910
    %v1334 = vunpack.c.h.b16 %v910
    %v1335 = vunpack.c.l.b16 %v911
    %v1336 = vunpack.c.h.b16 %v911
    %v1337 = vunpack.c.l.b16 %v912
    %v1338 = vunpack.c.h.b16 %v912
    %v1339 = vunpack.c.l.b16 %v913
    %v1340 = vunpack.c.h.b16 %v913
    %v1341 = vunpack.c.l.b16 %v914
    %v1342 = vunpack.c.h.b16 %v914
    %v1343 = vunpack.c.l.b16 %v915
    %v1344 = vunpack.c.h.b16 %v915
    %v1345 = vunpack.c.l.b16 %v916
    %v1346 = vunpack.c.h.b16 %v916
    %v1347 = vunpack.c.l.b16 %v917
    %v1348 = vunpack.c.h.b16 %v917
    %v1349 = vunpack.c.l.b16 %v918
    %v1350 = vunpack.c.h.b16 %v918
    %v1351 = vunpack.c.l.b16 %v919
    %v1352 = vunpack.c.h.b16 %v919
    %v1353 = vunpack.c.l.b16 %v920
    %v1354 = vunpack.c.h.b16 %v920
    %v1355 = vunpack.c.l.b16 %v921
    %v1356 = vunpack.c.h.b16 %v921
    %v1357 = vunpack.c.l.b16 %v922
    %v1358 = vunpack.c.h.b16 %v922
    %v1359 = vunpack.c.l.b16 %v923
    %v1360 = vunpack.c.h.b16 %v923
    %v1361 = vunpack.c.l.b16 %v924
    %v1362 = vunpack.c.h.b16 %v924
    %v1363 = vunpack.c.l.b16 %v925
    %v1364 = vunpack.c.h.b16 %v925
    %v1365 = vunpack.c.l.b16 %v926
    %v1366 = vunpack.c.h.b16 %v926
    %v1367 = vunpack.c.l.b16 %v927
    %v1368 = vunpack.c.h.b16 %v927
    %v1369 = vunpack.c.l.b16 %v928
    %v1370 = vunpack.c.h.b16 %v928
    %v1371 = vunpack.c.l.b16 %v929
    %v1372 = vunpack.c.h.b16 %v929
    %v1373 = vunpack.c.l.b16 %v930
    %v1374 = vunpack.c.h.b16 %v930
    %v1375 = vunpack.c.l.b16 %v931
    %v1376 = vunpack.c.h.b16 %v931
    %v1377 = vunpack.c.l.b16 %v932
    %v1378 = vunpack.c.h.b16 %v932
    %v1379 = vunpack.c.l.b16 %v933
    %v1380 = vunpack.c.h.b16 %v933
    %v1381 = vunpack.c.l.b16 %v934
    %v1382 = vunpack.c.h.b16 %v934
    %v1383 = vunpack.c.l.b16 %v935
    %v1384 = vunpack.c.h.b16 %v935
    %v1385 = vunpack.c.l.b16 %v936
    %v1386 = vunpack.c.h.b16 %v936
    %v1387 = vunpack.c.l.b16 %v937
    %v1388 = vunpack.c.h.b16 %v937
    %v1389 = vunpack.c.l.b16 %v938
    %v1390 = vunpack.c.h.b16 %v938
    %v1391 = vunpack.c.l.b16 %v939
    %v1392 = vunpack.c.h.b16 %v939
    %v1393 = vunpack.c.l.b16 %v940
    %v1394 = vunpack.c.h.b16 %v940
    %v1395 = vunpack.c.l.b16 %v941
    %v1396 = vunpack.c.h.b16 %v941
    %v1397 = vunpack.c.l.b16 %v942
    %v1398 = vunpack.c.h.b16 %v942
    %v1399 = vunpack.c.l.b16 %v943
    %v1400 = vunpack.c.h.b16 %v943
    %v1401 = vunpack.c.l.b16 %v944
    %v1402 = vunpack.c.h.b16 %v944
    %v1403 = vunpack.c.l.b16 %v945
    %v1404 = vunpack.c.h.b16 %v945
    %v1405 = vunpack.c.l.b16 %v946
    %v1406 = vunpack.c.h.b16 %v946
    %v1407 = vunpack.c.l.b16 %v947
    %v1408 = vunpack.c.h.b16 %v947
    %v1409 = vunpack.c.l.b16 %v948
    %v1410 = vunpack.c.h.b16 %v948
    %v1411 = vunpack.c.l.b16 %v949
    %v1412 = vunpack.c.h.b16 %v949
    %v1413 = vunpack.c.l.b16 %v950
    %v1414 = vunpack.c.h.b16 %v950
    %v1415 = vunpack.c.l.b16 %v951
    %v1416 = vunpack.c.h.b16 %v951
    %v1417 = vunpack.c.l.b16 %v952
    %v1418 = vunpack.c.h.b16 %v952
    %v1419 = vunpack.c.l.b16 %v953
    %v1420 = vunpack.c.h.b16 %v953
    %v1421 = vunpack.c.l.b16 %v954
    %v1422 = vunpack.c.h.b16 %v954
    %v1423 = vunpack.c.l.b16 %v955
    %v1424 = vunpack.c.h.b16 %v955
    %v1425 = vunpack.c.l.b16 %v956
    %v1426 = vunpack.c.h.b16 %v956
    %v1427 = vunpack.c.l.b16 %v957
    %v1428 = vunpack.c.h.b16 %v957
    %v1429 = vunpack.c.l.b16 %v958
    %v1430 = vunpack.c.h.b16 %v958
    %v1431 = vunpack.c.l.b16 %v959
    %v1432 = vunpack.c.h.b16 %v959
    %v1433 = vunpack.c.l.b16 %v960
    %v1434 = vunpack.c.h.b16 %v960
    %v1435 = vunpack.c.l.b16 %v961
    %v1436 = vunpack.c.h.b16 %v961
    %v1437 = vunpack.c.l.b16 %v962
    %v1438 = vunpack.c.h.b16 %v962
    %v1439 = vunpack.c.l.b16 %v963
    %v1440 = vunpack.c.h.b16 %v963
    %v1441 = vunpack.c.l.b16 %v964
    %v1442 = vunpack.c.h.b16 %v964
    %v1443 = vunpack.c.l.b16 %v965
    %v1444 = vunpack.c.h.b16 %v965
    %v1445 = vunpack.c.l.b16 %v966
    %v1446 = vunpack.c.h.b16 %v966
    %v1447 = vunpack.c.l.b16 %v967
    %v1448 = vunpack.c.h.b16 %v967
    %v1449 = vunpack.c.l.b16 %v968
    %v1450 = vunpack.c.h.b16 %v968
    %v1451 = vunpack.c.l.b16 %v969
    %v1452 = vunpack.c.h.b16 %v969
    %v1453 = vunpack.c.l.b16 %v970
    %v1454 = vunpack.c.h.b16 %v970
    %v1455 = vunpack.c.l.b16 %v971
    %v1456 = vunpack.c.h.b16 %v971
    %v1457 = vunpack.c.l.b16 %v972
    %v1458 = vunpack.c.h.b16 %v972
    %v1459 = vunpack.c.l.b16 %v973
    %v1460 = vunpack.c.h.b16 %v973
    %v1461 = vunpack.c.l.b16 %v974
    %v1462 = vunpack.c.h.b16 %v974
    %v1463 = vunpack.c.l.b16 %v975
    %v1464 = vunpack.c.h.b16 %v975
    %v1465 = vunpack.c.l.b16 %v976
    %v1466 = vunpack.c.h.b16 %v976
    %v1467 = vunpack.c.l.b16 %v977
    %v1468 = vunpack.c.h.b16 %v977
    %v1469 = vunpack.c.l.b16 %v978
    %v1470 = vunpack.c.h.b16 %v978
    %v1471 = vunpack.c.l.b16 %v979
    %v1472 = vunpack.c.h.b16 %v979
    %v1473 = vunpack.c.l.b16 %v980
    %v1474 = vunpack.c.h.b16 %v980
    %v1475 = vunpack.c.l.b16 %v981
    %v1476 = vunpack.c.h.b16 %v981
    %v1477 = vunpack.c.l.b16 %v982
    %v1478 = vunpack.c.h.b16 %v982
    %v1479 = vunpack.c.l.b16 %v983
    %v1480 = vunpack.c.h.b16 %v983
    %v1481 = vunpack.c.l.b16 %v984
    %v1482 = vunpack.c.h.b16 %v984
    %v1483 = vunpack.c.l.b16 %v985
    %v1484 = vunpack.c.h.b16 %v985
    %v1485 = vunpack.c.l.b16 %v986
    %v1486 = vunpack.c.h.b16 %v986
    %v1487 = vunpack.c.l.b16 %v987
    %v1488 = vunpack.c.h.b16 %v987
    %v1489 = vunpack.c.l.b16 %v988
    %v1490 = vunpack.c.h.b16 %v988
    %v1491 = vunpack.c.l.b16 %v989
    %v1492 = vunpack.c.h.b16 %v989
    %v1493 = vunpack.c.l.b16 %v990
    %v1494 = vunpack.c.h.b16 %v990
    %v1495 = vunpack.c.l.b16 %v991
    %v1496 = vunpack.c.h.b16 %v991
    %v1497 = vunpack.c.l.b16 %v992
    %v1498 = vunpack.c.h.b16 %v992
    %v1499 = vunpack.c.l.b16 %v993
    %v1500 = vunpack.c.h.b16 %v993
    %v1501 = vunpack.c.l.b16 %v994
    %v1502 = vunpack.c.h.b16 %v994
    %v1503 = vunpack.c.l.b16 %v995
    %v1504 = vunpack.c.h.b16 %v995
    %v1505 = vunpack.c.l.b16 %v996
    %v1506 = vunpack.c.h.b16 %v996
    %v1507 = vunpack.c.l.b16 %v997
    %v1508 = vunpack.c.h.b16 %v997
    %v1509 = vunpack.c.l.b16 %v998
    %v1510 = vunpack.c.h.b16 %v998
    %v1511 = vunpack.c.l.b16 %v999
    %v1512 = vunpack.c.h.b16 %v999
    %v1513 = vunpack.c.l.b16 %v1000
    %v1514 = vunpack.c.h.b16 %v1000
    %v1515 = vunpack.c.l.b16 %v1001
    %v1516 = vunpack.c.h.b16 %v1001
    %v1517 = vunpack.c.l.b16 %v1002
    %v1518 = vunpack.c.h.b16 %v1002
    %v1519 = vunpack.c.l.b16 %v1003
    %v1520 = vunpack.c.h.b16 %v1003
    %v1521 = vunpack.c.l.b16 %v1004
    %v1522 = vunpack.c.h.b16 %v1004
    %v1523 = vunpack.c.l.b16 %v1005
    %v1524 = vunpack.c.h.b16 %v1005
    %v1525 = vunpack.c.l.b16 %v1006
    %v1526 = vunpack.c.h.b16 %v1006
    %v1527 = vunpack.c.l.b16 %v1007
    %v1528 = vunpack.c.h.b16 %v1007
    %v1529 = vunpack.c.l.b16 %v1008
    %v1530 = vunpack.c.h.b16 %v1008
    %v1531 = vunpack.c.l.b16 %v1009
    %v1532 = vunpack.c.h.b16 %v1009
    %v1533 = vunpack.c.l.b16 %v1010
    %v1534 = vunpack.c.h.b16 %v1010
    %v1535 = vunpack.c.l.b16 %v1011
    %v1536 = vunpack.c.h.b16 %v1011
    %v1537 = vunpack.c.l.b16 %v1012
    %v1538 = vunpack.c.h.b16 %v1012
    %v1539 = vunpack.c.l.b16 %v1013
    %v1540 = vunpack.c.h.b16 %v1013
    %v1541 = vunpack.c.l.b16 %v1014
    %v1542 = vunpack.c.h.b16 %v1014
    %v1543 = vunpack.c.l.b16 %v1015
    %v1544 = vunpack.c.h.b16 %v1015
    %v1545 = vunpack.c.l.b16 %v1016
    %v1546 = vunpack.c.h.b16 %v1016
    %v1547 = vunpack.c.l.b16 %v1017
    %v1548 = vunpack.c.h.b16 %v1017
    %v1549 = vunpack.c.l.b16 %v1018
    %v1550 = vunpack.c.h.b16 %v1018
    %v1551 = vunpack.c.l.b16 %v1019
    %v1552 = vunpack.c.h.b16 %v1019
    %v1553 = vunpack.c.l.b16 %v1020
    %v1554 = vunpack.c.h.b16 %v1020
    %v1555 = vunpack.c.l.b16 %v1021
    %v1556 = vunpack.c.h.b16 %v1021
    %v1557 = vunpack.c.l.b16 %v1022
    %v1558 = vunpack.c.h.b16 %v1022
    %v1559 = vunpack.c.l.b16 %v1023
    %v1560 = vunpack.c.h.b16 %v1023
    %v1561 = vunpack.c.l.b16 %v1024
    %v1562 = vunpack.c.h.b16 %v1024
    %v1563 = vunpack.c.l.b16 %v1025
    %v1564 = vunpack.c.h.b16 %v1025
    %v1565 = vunpack.c.l.b16 %v1026
    %v1566 = vunpack.c.h.b16 %v1026
    %v1567 = vunpack.c.l.b16 %v1027
    %v1568 = vunpack.c.h.b16 %v1027
    %v1569 = vunpack.c.l.b16 %v1028
    %v1570 = vunpack.c.h.b16 %v1028
    %v1571 = vunpack.c.l.b16 %v1029
    %v1572 = vunpack.c.h.b16 %v1029
    %v1573 = vunpack.c.l.b16 %v1030
    %v1574 = vunpack.c.h.b16 %v1030
    %v1575 = vunpack.c.l.b16 %v1031
    %v1576 = vunpack.c.h.b16 %v1031
    %v1577 = vunpack.c.l.b16 %v1032
    %v1578 = vunpack.c.h.b16 %v1032
    %v1579 = vunpack.c.l.b16 %v1033
    %v1580 = vunpack.c.h.b16 %v1033
    %v1581 = vunpack.c.l.b16 %v1034
    %v1582 = vunpack.c.h.b16 %v1034
    %v1583 = vunpack.c.l.b16 %v1035
    %v1584 = vunpack.c.h.b16 %v1035
    %v1585 = vunpack.c.l.b16 %v1036
    %v1586 = vunpack.c.h.b16 %v1036
    %v1587 = vunpack.c.l.b16 %v1037
    %v1588 = vunpack.c.h.b16 %v1037
    %v1589 = vunpack.c.l.b16 %v1038
    %v1590 = vunpack.c.h.b16 %v1038
    %v1591 = vunpack.c.l.b16 %v1039
    %v1592 = vunpack.c.h.b16 %v1039
    %v1593 = vunpack.c.l.b16 %v1040
    %v1594 = vunpack.c.h.b16 %v1040
    %v1595 = vunpack.c.l.b16 %v1041
    %v1596 = vunpack.c.h.b16 %v1041
    %v1597 = vunpack.c.l.b16 %v1042
    %v1598 = vunpack.c.h.b16 %v1042
    %v1599 = vunpack.c.l.b16 %v1043
    %v1600 = vunpack.c.h.b16 %v1043
    %v1601 = vunpack.c.l.b16 %v1044
    %v1602 = vunpack.c.h.b16 %v1044
    %v1603 = vunpack.c.l.b16 %v1045
    %v1604 = vunpack.c.h.b16 %v1045
    %v1605 = vunpack.c.l.b16 %v1046
    %v1606 = vunpack.c.h.b16 %v1046
    %v1607 = vunpack.c.l.b16 %v1047
    %v1608 = vunpack.c.h.b16 %v1047
    %v1609 = vunpack.c.l.b16 %v1048
    %v1610 = vunpack.c.h.b16 %v1048
    %v1611 = vunpack.c.l.b16 %v1049
    %v1612 = vunpack.c.h.b16 %v1049
    %v1613 = vunpack.c.l.b16 %v1050
    %v1614 = vunpack.c.h.b16 %v1050
    %v1615 = vunpack.c.l.b16 %v1051
    %v1616 = vunpack.c.h.b16 %v1051
    %v1617 = vunpack.c.l.b16 %v1052
    %v1618 = vunpack.c.h.b16 %v1052
    %v1619 = vunpack.c.l.b16 %v1053
    %v1620 = vunpack.c.h.b16 %v1053
    %v1621 = vunpack.c.l.b16 %v1054
    %v1622 = vunpack.c.h.b16 %v1054
    %v1623 = vunpack.c.l.b16 %v1055
    %v1624 = vunpack.c.h.b16 %v1055
    %v1625 = vunpack.c.l.b16 %v1056
    %v1626 = vunpack.c.h.b16 %v1056
    %v1627 = vunpack.c.l.b16 %v1057
    %v1628 = vunpack.c.h.b16 %v1057
    %v1629 = vunpack.c.l.b16 %v1058
    %v1630 = vunpack.c.h.b16 %v1058
    %v1631 = vunpack.c.l.b16 %v1059
    %v1632 = vunpack.c.h.b16 %v1059
    %v1633 = vunpack.c.l.b16 %v1060
    %v1634 = vunpack.c.h.b16 %v1060
    %v1635 = vunpack.c.l.b16 %v1061
    %v1636 = vunpack.c.h.b16 %v1061
    %v1637 = vunpack.c.l.b16 %v1062
    %v1638 = vunpack.c.h.b16 %v1062
    %v1639 = vunpack.c.l.b16 %v1063
    %v1640 = vunpack.c.h.b16 %v1063
    %v1641 = vunpack.c.l.b16 %v1064
    %v1642 = vunpack.c.h.b16 %v1064
    %v1643 = vunpack.c.l.b16 %v1065
    %v1644 = vunpack.c.h.b16 %v1065
    %v1645 = vunpack.c.l.b16 %v1066
    %v1646 = vunpack.c.h.b16 %v1066
    %v1647 = vunpack.c.l.b16 %v1067
    %v1648 = vunpack.c.h.b16 %v1067
    %v1649 = vunpack.c.l.b16 %v1068
    %v1650 = vunpack.c.h.b16 %v1068
    %v1651 = vunpack.c.l.b16 %v1069
    %v1652 = vunpack.c.h.b16 %v1069
    %v1653 = vunpack.c.l.b16 %v1070
    %v1654 = vunpack.c.h.b16 %v1070
    %v1655 = vunpack.c.l.b16 %v1071
    %v1656 = vunpack.c.h.b16 %v1071
    %v1657 = vunpack.c.l.b16 %v1072
    %v1658 = vunpack.c.h.b16 %v1072
    %v1659 = vunpack.c.l.b16 %v1073
    %v1660 = vunpack.c.h.b16 %v1073
    %v1661 = vunpack.c.l.b16 %v1074
    %v1662 = vunpack.c.h.b16 %v1074
    %v1663 = vunpack.c.l.b16 %v1075
    %v1664 = vunpack.c.h.b16 %v1075
    %v1665 = vunpack.c.l.b16 %v1076
    %v1666 = vunpack.c.h.b16 %v1076
    %v1667 = vunpack.c.l.b16 %v1077
    %v1668 = vunpack.c.h.b16 %v1077
    %v1669 = vunpack.c.l.b16 %v1078
    %v1670 = vunpack.c.h.b16 %v1078
    %v1671 = vunpack.c.l.b16 %v1079
    %v1672 = vunpack.c.h.b16 %v1079
    %v1673 = vunpack.c.l.b16 %v1080
    %v1674 = vunpack.c.h.b16 %v1080
    %v1675 = vunpack.c.l.b16 %v1081
    %v1676 = vunpack.c.h.b16 %v1081
    %v1677 = vunpack.c.l.b16 %v1082
    %v1678 = vunpack.c.h.b16 %v1082
    %v1679 = vunpack.c.l.b16 %v1083
    %v1680 = vunpack.c.h.b16 %v1083
    %v1681 = vunpack.c.l.b16 %v1084
    %v1682 = vunpack.c.h.b16 %v1084
    %v1683 = vunpack.c.l.b16 %v1085
    %v1684 = vunpack.c.h.b16 %v1085
    %v1685 = vunpack.c.l.b16 %v1086
    %v1686 = vunpack.c.h.b16 %v1086
    %v1687 = vunpack.c.l.b16 %v1087
    %v1688 = vunpack.c.h.b16 %v1087
    %v1689 = vunpack.c.l.b16 %v1088
    %v1690 = vunpack.c.h.b16 %v1088
    %v1691 = vunpack.c.l.b16 %v1089
    %v1692 = vunpack.c.h.b16 %v1089
    %v1693 = vunpack.c.l.b16 %v1090
    %v1694 = vunpack.c.h.b16 %v1090
    %v1695 = vunpack.c.l.b16 %v1091
    %v1696 = vunpack.c.h.b16 %v1091
    %v1697 = vunpack.c.l.b16 %v1092
    %v1698 = vunpack.c.h.b16 %v1092
    %v1699 = vunpack.c.l.b16 %v1093
    %v1700 = vunpack.c.h.b16 %v1093
    %v1701 = vunpack.c.l.b16 %v1094
    %v1702 = vunpack.c.h.b16 %v1094
    %v1703 = vpack.c.b16 %v1325, %v1319
    %v1704 = vpack.c.b16 %v1326, %v1320
    %v1705 = vpack.c.b16 %v1327, %v1321
    %v1706 = vpack.c.b16 %v1328, %v1322
    %v1707 = vpack.c.b16 %v1329, %v1323
    %v1708 = vpack.c.b16 %v1330, %v1324
    %v1709 = vpack.c.b16 %v1337, %v1331
    %v1710 = vpack.c.b16 %v1338, %v1332
    %v1711 = vpack.c.b16 %v1339, %v1333
    %v1712 = vpack.c.b16 %v1340, %v1334
    %v1713 = vpack.c.b16 %v1341, %v1335
    %v1714 = vpack.c.b16 %v1342, %v1336
    %v1715 = vpack.c.b16 %v1349, %v1343
    %v1716 = vpack.c.b16 %v1350, %v1344
    %v1717 = vpack.c.b16 %v1351, %v1345
    %v1718 = vpack.c.b16 %v1352, %v1346
    %v1719 = vpack.c.b16 %v1353, %v1347
    %v1720 = vpack.c.b16 %v1354, %v1348
    %v1721 = vpack.c.b16 %v1361, %v1355
    %v1722 = vpack.c.b16 %v1362, %v1356
    %v1723 = vpack.c.b16 %v1363, %v1357
    %v1724 = vpack.c.b16 %v1364, %v1358
    %v1725 = vpack.c.b16 %v1365, %v1359
    %v1726 = vpack.c.b16 %v1366, %v1360
    %v1727 = vpack.c.b16 %v1373, %v1367
    %v1728 = vpack.c.b16 %v1374, %v1368
    %v1729 = vpack.c.b16 %v1375, %v1369
    %v1730 = vpack.c.b16 %v1376, %v1370
    %v1731 = vpack.c.b16 %v1377, %v1371
    %v1732 = vpack.c.b16 %v1378, %v1372
    %v1733 = vpack.c.b16 %v1385, %v1379
    %v1734 = vpack.c.b16 %v1386, %v1380
    %v1735 = vpack.c.b16 %v1387, %v1381
    %v1736 = vpack.c.b16 %v1388, %v1382
    %v1737 = vpack.c.b16 %v1389, %v1383
    %v1738 = vpack.c.b16 %v1390, %v1384
    %v1739 = vpack.c.b16 %v1397, %v1391
    %v1740 = vpack.c.b16 %v1398, %v1392
    %v1741 = vpack.c.b16 %v1399, %v1393
    %v1742 = vpack.c.b16 %v1400, %v1394
    %v1743 = vpack.c.b16 %v1401, %v1395
    %v1744 = vpack.c.b16 %v1402, %v1396
    %v1745 = vpack.c.b16 %v1409, %v1403
    %v1746 = vpack.c.b16 %v1410, %v1404
    %v1747 = vpack.c.b16 %v1411, %v1405
    %v1748 = vpack.c.b16 %v1412, %v1406
    %v1749 = vpack.c.b16 %v1413, %v1407
    %v1750 = vpack.c.b16 %v1414, %v1408
    %v1751 = vpack.c.b16 %v1421, %v1415
    %v1752 = vpack.c.b16 %v1422, %v1416
    %v1753 = vpack.c.b16 %v1423, %v1417
    %v1754 = vpack.c.b16 %v1424, %v1418
    %v1755 = vpack.c.b16 %v1425, %v1419
    %v1756 = vpack.c.b16 %v1426, %v1420
    %v1757 = vpack.c.b16 %v1433, %v1427
    %v1758 = vpack.c.b16 %v1434, %v1428
    %v1759 = vpack.c.b16 %v1435, %v1429
    %v1760 = vpack.c.b16 %v1436, %v1430
    %v1761 = vpack.c.b16 %v1437, %v1431
    %v1762 = vpack.c.b16 %v1438, %v1432
    %v1763 = vpack.c.b16 %v1445, %v1439
    %v1764 = vpack.c.b16 %v1446, %v1440
    %v1765 = vpack.c.b16 %v1447, %v1441
    %v1766 = vpack.c.b16 %v1448, %v1442
    %v1767 = vpack.c.b16 %v1449, %v1443
    %v1768 = vpack.c.b16 %v1450, %v1444
    %v1769 = vpack.c.b16 %v1457, %v1451
    %v1770 = vpack.c.b16 %v1458, %v1452
    %v1771 = vpack.c.b16 %v1459, %v1453
    %v1772 = vpack.c.b16 %v1460, %v1454
    %v1773 = vpack.c.b16 %v1461, %v1455
    %v1774 = vpack.c.b16 %v1462, %v1456
    %v1775 = vpack.c.b16 %v1469, %v1463
    %v1776 = vpack.c.b16 %v1470, %v1464
    %v1777 = vpack.c.b16 %v1471, %v1465
    %v1778 = vpack.c.b16 %v1472, %v1466
    %v1779 = vpack.c.b16 %v1473, %v1467
    %v1780 = vpack.c.b16 %v1474, %v1468
    %v1781 = vpack.c.b16 %v1481, %v1475
    %v1782 = vpack.c.b16 %v1482, %v1476
    %v1783 = vpack.c.b16 %v1483, %v1477
    %v1784 = vpack.c.b16 %v1484, %v1478
    %v1785 = vpack.c.b16 %v1485, %v1479
    %v1786 = vpack.c.b16 %v1486, %v1480
    %v1787 = vpack.c.b16 %v1493, %v1487
    %v1788 = vpack.c.b16 %v1494, %v1488
    %v1789 = vpack.c.b16 %v1495, %v1489
    %v1790 = vpack.c.b16 %v1496, %v1490
    %v1791 = vpack.c.b16 %v1497, %v1491
    %v1792 = vpack.c.b16 %v1498, %v1492
    %v1793 = vpack.c.b16 %v1505, %v1499
    %v1794 = vpack.c.b16 %v1506, %v1500
    %v1795 = vpack.c.b16 %v1507, %v1501
    %v1796 = vpack.c.b16 %v1508, %v1502
    %v1797 = vpack.c.b16 %v1509, %v1503
    %v1798 = vpack.c.b16 %v1510, %v1504
    %v1799 = vpack.c.b16 %v1517, %v1511
    %v1800 = vpack.c.b16 %v1518, %v1512
    %v1801 = vpack.c.b16 %v1519, %v1513
    %v1802 = vpack.c.b16 %v1520, %v1514
    %v1803 = vpack.c.b16 %v1521, %v1515
    %v1804 = vpack.c.b16 %v1522, %v1516
    %v1805 = vpack.c.b16 %v1529, %v1523
    %v1806 = vpack.c.b16 %v1530, %v1524
    %v1807 = vpack.c.b16 %v1531, %v1525
    %v1808 = vpack.c.b16 %v1532, %v1526
    %v1809 = vpack.c.b16 %v1533, %v1527
    %v1810 = vpack.c.b16 %v1534, %v1528
    %v1811 = vpack.c.b16 %v1541, %v1535
    %v1812 = vpack.c.b16 %v1542, %v1536
    %v1813 = vpack.c.b16 %v1543, %v1537
    %v1814 = vpack.c.b16 %v1544, %v1538
    %v1815 = vpack.c.b16 %v1545, %v1539
    %v1816 = vpack.c.b16 %v1546, %v1540
    %v1817 = vpack.c.b16 %v1553, %v1547
    %v1818 = vpack.c.b16 %v1554, %v1548
    %v1819 = vpack.c.b16 %v1555, %v1549
    %v1820 = vpack.c.b16 %v1556, %v1550
    %v1821 = vpack.c.b16 %v1557, %v1551
    %v1822 = vpack.c.b16 %v1558, %v1552
    %v1823 = vpack.c.b16 %v1565, %v1559
    %v1824 = vpack.c.b16 %v1566, %v1560
    %v1825 = vpack.c.b16 %v1567, %v1561
    %v1826 = vpack.c.b16 %v1568, %v1562
    %v1827 = vpack.c.b16 %v1569, %v1563
    %v1828 = vpack.c.b16 %v1570, %v1564
    %v1829 = vpack.c.b16 %v1577, %v1571
    %v1830 = vpack.c.b16 %v1578, %v1572
    %v1831 = vpack.c.b16 %v1579, %v1573
    %v1832 = vpack.c.b16 %v1580, %v1574
    %v1833 = vpack.c.b16 %v1581, %v1575
    %v1834 = vpack.c.b16 %v1582, %v1576
    %v1835 = vpack.c.b16 %v1589, %v1583
    %v1836 = vpack.c.b16 %v1590, %v1584
    %v1837 = vpack.c.b16 %v1591, %v1585
    %v1838 = vpack.c.b16 %v1592, %v1586
    %v1839 = vpack.c.b16 %v1593, %v1587
    %v1840 = vpack.c.b16 %v1594, %v1588
    %v1841 = vpack.c.b16 %v1601, %v1595
    %v1842 = vpack.c.b16 %v1602, %v1596
    %v1843 = vpack.c.b16 %v1603, %v1597
    %v1844 = vpack.c.b16 %v1604, %v1598
    %v1845 = vpack.c.b16 %v1605, %v1599
    %v1846 = vpack.c.b16 %v1606, %v1600
    %v1847 = vpack.c.b16 %v1613, %v1607
    %v1848 = vpack.c.b16 %v1614, %v1608
    %v1849 = vpack.c.b16 %v1615, %v1609
    %v1850 = vpack.c.b16 %v1616, %v1610
    %v1851 = vpack.c.b16 %v1617, %v1611
    %v1852 = vpack.c.b16 %v1618, %v1612
    %v1853 = vpack.c.b16 %v1625, %v1619
    %v1854 = vpack.c.b16 %v1626, %v1620
    %v1855 = vpack.c.b16 %v1627, %v1621
    %v1856 = vpack.c.b16 %v1628, %v1622
    %v1857 = vpack.c.b16 %v1629, %v1623
    %v1858 = vpack.c.b16 %v1630, %v1624
    %v1859 = vpack.c.b16 %v1637, %v1631
    %v1860 = vpack.c.b16 %v1638, %v1632
    %v1861 = vpack.c.b16 %v1639, %v1633
    %v1862 = vpack.c.b16 %v1640, %v1634
    %v1863 = vpack.c.b16 %v1641, %v1635
    %v1864 = vpack.c.b16 %v1642, %v1636
    %v1865 = vpack.c.b16 %v1649, %v1643
    %v1866 = vpack.c.b16 %v1650, %v1644
    %v1867 = vpack.c.b16 %v1651, %v1645
    %v1868 = vpack.c.b16 %v1652, %v1646
    %v1869 = vpack.c.b16 %v1653, %v1647
    %v1870 = vpack.c.b16 %v1654, %v1648
    %v1871 = vpack.c.b16 %v1661, %v1655
    %v1872 = vpack.c.b16 %v1662, %v1656
    %v1873 = vpack.c.b16 %v1663, %v1657
    %v1874 = vpack.c.b16 %v1664, %v1658
    %v1875 = vpack.c.b16 %v1665, %v1659
    %v1876 = vpack.c.b16 %v1666, %v1660
    %v1877 = vpack.c.b16 %v1673, %v1667
    %v1878 = vpack.c.b16 %v1674, %v1668
    %v1879 = vpack.c.b16 %v1675, %v1669
    %v1880 = vpack.c.b16 %v1676, %v1670
    %v1881 = vpack.c.b16 %v1677, %v1671
    %v1882 = vpack.c.b16 %v1678, %v1672
    %v1883 = vpack.c.b16 %v1685, %v1679
    %v1884 = vpack.c.b16 %v1686, %v1680
    %v1885 = vpack.c.b16 %v1687, %v1681
    %v1886 = vpack.c.b16 %v1688, %v1682
    %v1887 = vpack.c.b16 %v1689, %v1683
    %v1888 = vpack.c.b16 %v1690, %v1684
    %v1889 = vpack.c.b16 %v1697, %v1691
    %v1890 = vpack.c.b16 %v1698, %v1692
    %v1891 = vpack.c.b16 %v1699, %v1693
    %v1892 = vpack.c.b16 %v1700, %v1694
    %v1893 = vpack.c.b16 %v1701, %v1695
    %v1894 = vpack.c.b16 %v1702, %v1696
    %2087 = vmatprep.subr.bf16.mxu0 %v1746
    %2088 = vmatpush1.bf16.msra.mxu0 %v1745
    %2089 = vmatprep.subr.bf16.mxu0 %v1740
    %2090 = vmatpush1.bf16.msra.mxu0 %v1739
    %2091 = vmatprep.subr.bf16.mxu0 %v1734
    %2092 = vmatpush1.bf16.msra.mxu0 %v1733
    %2093 = vmatprep.subr.bf16.mxu0 %v1728
    %2094 = vmatpush1.bf16.msra.mxu0 %v1727
    %2095 = vmatprep.subr.bf16.mxu0 %v1722
    %2096 = vmatpush1.bf16.msra.mxu0 %v1721
    %2097 = vmatprep.subr.bf16.mxu0 %v1716
    %2098 = vmatpush1.bf16.msra.mxu0 %v1715
    %2099 = vmatprep.subr.bf16.mxu0 %v1710
    %2100 = vmatpush1.bf16.msra.mxu0 %v1709
    %2101 = vmatprep.subr.bf16.mxu0 %v1704
    %2102 = vmatpush1.bf16.msra.mxu0 %v1703
    %2103 = vmatprep.subr.bf16.mxu0 %v1794
    %2104 = vmatpush2.bf16.msra.mxu0 %v1793
    %2105 = vmatprep.subr.bf16.mxu0 %v1788
    %2106 = vmatpush2.bf16.msra.mxu0 %v1787
    %2107 = vmatprep.subr.bf16.mxu0 %v1782
    %2108 = vmatpush2.bf16.msra.mxu0 %v1781
    %2109 = vmatprep.subr.bf16.mxu0 %v1776
    %2110 = vmatpush2.bf16.msra.mxu0 %v1775
    %2111 = vmatprep.subr.bf16.mxu0 %v1770
    %2112 = vmatpush2.bf16.msra.mxu0 %v1769
    %2113 = vmatprep.subr.bf16.mxu0 %v1764
    %2114 = vmatpush2.bf16.msra.mxu0 %v1763
    %2115 = vmatprep.subr.bf16.mxu0 %v1758
    %2116 = vmatpush2.bf16.msra.mxu0 %v1757
    %2117 = vmatprep.subr.bf16.mxu0 %v1752
    %2118 = vmatpush2.bf16.msra.mxu0 %v1751
    %2119 = vmatprep.mubr.bf16.mxu0 %v900
    %2120 = vmatmul.mubr.bf16.gmra.mxu0 %v899
    %v2121 = vpop.f32.mrf.mxu0
    %v2122 = vadd.f32 %v1100, %v2121
    %v2123 = vpop.f32.mrf.mxu0
    %v2124 = vadd.f32 %v1104, %v2123
    %v2125 = vpop.f32.mrf.mxu0
    %v2126 = vpop.f32.mrf.mxu0
    %2127 = vdwg.mxu0
    %2128 = vmatprep.subr.bf16.mxu0 %v1842
    %2129 = vmatpush1.bf16.msra.mxu0 %v1841
    %2130 = vmatprep.subr.bf16.mxu0 %v1836
    %2131 = vmatpush1.bf16.msra.mxu0 %v1835
    %2132 = vmatprep.subr.bf16.mxu0 %v1830
    %2133 = vmatpush1.bf16.msra.mxu0 %v1829
    %2134 = vmatprep.subr.bf16.mxu0 %v1824
    %2135 = vmatpush1.bf16.msra.mxu0 %v1823
    %2136 = vmatprep.subr.bf16.mxu0 %v1818
    %2137 = vmatpush1.bf16.msra.mxu0 %v1817
    %2138 = vmatprep.subr.bf16.mxu0 %v1812
    %2139 = vmatpush1.bf16.msra.mxu0 %v1811
    %2140 = vmatprep.subr.bf16.mxu0 %v1806
    %2141 = vmatpush1.bf16.msra.mxu0 %v1805
    %2142 = vmatprep.subr.bf16.mxu0 %v1800
    %2143 = vmatpush1.bf16.msra.mxu0 %v1799
    %2144 = vmatprep.subr.bf16.mxu0 %v1890
    %2145 = vmatpush2.bf16.msra.mxu0 %v1889
    %2146 = vmatprep.subr.bf16.mxu0 %v1884
    %2147 = vmatpush2.bf16.msra.mxu0 %v1883
    %2148 = vmatprep.subr.bf16.mxu0 %v1878
    %2149 = vmatpush2.bf16.msra.mxu0 %v1877
    %2150 = vmatprep.subr.bf16.mxu0 %v1872
    %2151 = vmatpush2.bf16.msra.mxu0 %v1871
    %2152 = vmatprep.subr.bf16.mxu0 %v1866
    %2153 = vmatpush2.bf16.msra.mxu0 %v1865
    %2154 = vmatprep.subr.bf16.mxu0 %v1860
    %2155 = vmatpush2.bf16.msra.mxu0 %v1859
    %2156 = vmatprep.subr.bf16.mxu0 %v1854
    %2157 = vmatpush2.bf16.msra.mxu0 %v1853
    %2158 = vmatprep.subr.bf16.mxu0 %v1848
    %2159 = vmatpush2.bf16.msra.mxu0 %v1847
    %2160 = vmatprep.mubr.bf16.mxu0 %v902
    %2161 = vmatmul.mubr.bf16.gmra.mxu0 %v901
    %v2162 = vpop.f32.mrf.mxu0
    %v2163 = vadd.f32 %v2122, %v2162
    %v2164 = vpop.f32.mrf.mxu0
    %v2165 = vadd.f32 %v2124, %v2164
    %v2166 = vpop.f32.mrf.mxu0
    %v2167 = vpop.f32.mrf.mxu0
    %2168 = vdwg.mxu0
    %2169 = vmatprep.subr.bf16.mxu0 %v1748
    %2170 = vmatpush1.bf16.msra.mxu0 %v1747
    %2171 = vmatprep.subr.bf16.mxu0 %v1742
    %2172 = vmatpush1.bf16.msra.mxu0 %v1741
    %2173 = vmatprep.subr.bf16.mxu0 %v1736
    %2174 = vmatpush1.bf16.msra.mxu0 %v1735
    %2175 = vmatprep.subr.bf16.mxu0 %v1730
    %2176 = vmatpush1.bf16.msra.mxu0 %v1729
    %2177 = vmatprep.subr.bf16.mxu0 %v1724
    %2178 = vmatpush1.bf16.msra.mxu0 %v1723
    %2179 = vmatprep.subr.bf16.mxu0 %v1718
    %2180 = vmatpush1.bf16.msra.mxu0 %v1717
    %2181 = vmatprep.subr.bf16.mxu0 %v1712
    %2182 = vmatpush1.bf16.msra.mxu0 %v1711
    %2183 = vmatprep.subr.bf16.mxu0 %v1706
    %2184 = vmatpush1.bf16.msra.mxu0 %v1705
    %2185 = vmatprep.subr.bf16.mxu0 %v1796
    %2186 = vmatpush2.bf16.msra.mxu0 %v1795
    %2187 = vmatprep.subr.bf16.mxu0 %v1790
    %2188 = vmatpush2.bf16.msra.mxu0 %v1789
    %2189 = vmatprep.subr.bf16.mxu0 %v1784
    %2190 = vmatpush2.bf16.msra.mxu0 %v1783
    %2191 = vmatprep.subr.bf16.mxu0 %v1778
    %2192 = vmatpush2.bf16.msra.mxu0 %v1777
    %2193 = vmatprep.subr.bf16.mxu0 %v1772
    %2194 = vmatpush2.bf16.msra.mxu0 %v1771
    %2195 = vmatprep.subr.bf16.mxu0 %v1766
    %2196 = vmatpush2.bf16.msra.mxu0 %v1765
    %2197 = vmatprep.subr.bf16.mxu0 %v1760
    %2198 = vmatpush2.bf16.msra.mxu0 %v1759
    %2199 = vmatprep.subr.bf16.mxu0 %v1754
    %2200 = vmatpush2.bf16.msra.mxu0 %v1753
    %2201 = vmatprep.mubr.bf16.mxu0 %v900
    %2202 = vmatmul.mubr.bf16.gmra.mxu0 %v899
    %v2203 = vpop.f32.mrf.mxu0
    %v2204 = vadd.f32 %v1108, %v2203
    %v2205 = vpop.f32.mrf.mxu0
    %v2206 = vadd.f32 %v1112, %v2205
    %v2207 = vpop.f32.mrf.mxu0
    %v2208 = vpop.f32.mrf.mxu0
    %2209 = vdwg.mxu0
    %2210 = vmatprep.subr.bf16.mxu0 %v1844
    %2211 = vmatpush1.bf16.msra.mxu0 %v1843
    %2212 = vmatprep.subr.bf16.mxu0 %v1838
    %2213 = vmatpush1.bf16.msra.mxu0 %v1837
    %2214 = vmatprep.subr.bf16.mxu0 %v1832
    %2215 = vmatpush1.bf16.msra.mxu0 %v1831
    %2216 = vmatprep.subr.bf16.mxu0 %v1826
    %2217 = vmatpush1.bf16.msra.mxu0 %v1825
    %2218 = vmatprep.subr.bf16.mxu0 %v1820
    %2219 = vmatpush1.bf16.msra.mxu0 %v1819
    %2220 = vmatprep.subr.bf16.mxu0 %v1814
    %2221 = vmatpush1.bf16.msra.mxu0 %v1813
    %2222 = vmatprep.subr.bf16.mxu0 %v1808
    %2223 = vmatpush1.bf16.msra.mxu0 %v1807
    %2224 = vmatprep.subr.bf16.mxu0 %v1802
    %2225 = vmatpush1.bf16.msra.mxu0 %v1801
    %2226 = vmatprep.subr.bf16.mxu0 %v1892
    %2227 = vmatpush2.bf16.msra.mxu0 %v1891
    %2228 = vmatprep.subr.bf16.mxu0 %v1886
    %2229 = vmatpush2.bf16.msra.mxu0 %v1885
    %2230 = vmatprep.subr.bf16.mxu0 %v1880
    %2231 = vmatpush2.bf16.msra.mxu0 %v1879
    %2232 = vmatprep.subr.bf16.mxu0 %v1874
    %2233 = vmatpush2.bf16.msra.mxu0 %v1873
    %2234 = vmatprep.subr.bf16.mxu0 %v1868
    %2235 = vmatpush2.bf16.msra.mxu0 %v1867
    %2236 = vmatprep.subr.bf16.mxu0 %v1862
    %2237 = vmatpush2.bf16.msra.mxu0 %v1861
    %2238 = vmatprep.subr.bf16.mxu0 %v1856
    %2239 = vmatpush2.bf16.msra.mxu0 %v1855
    %2240 = vmatprep.subr.bf16.mxu0 %v1850
    %2241 = vmatpush2.bf16.msra.mxu0 %v1849
    %2242 = vmatprep.mubr.bf16.mxu0 %v902
    %2243 = vmatmul.mubr.bf16.gmra.mxu0 %v901
    %v2244 = vpop.f32.mrf.mxu0
    %v2245 = vadd.f32 %v2204, %v2244
    %v2246 = vpop.f32.mrf.mxu0
    %v2247 = vadd.f32 %v2206, %v2246
    %v2248 = vpop.f32.mrf.mxu0
    %v2249 = vpop.f32.mrf.mxu0
    %2250 = vdwg.mxu0
    %2251 = vmatprep.subr.bf16.mxu0 %v1750
    %2252 = vmatpush1.bf16.msra.mxu0 %v1749
    %2253 = vmatprep.subr.bf16.mxu0 %v1744
    %2254 = vmatpush1.bf16.msra.mxu0 %v1743
    %2255 = vmatprep.subr.bf16.mxu0 %v1738
    %2256 = vmatpush1.bf16.msra.mxu0 %v1737
    %2257 = vmatprep.subr.bf16.mxu0 %v1732
    %2258 = vmatpush1.bf16.msra.mxu0 %v1731
    %2259 = vmatprep.subr.bf16.mxu0 %v1726
    %2260 = vmatpush1.bf16.msra.mxu0 %v1725
    %2261 = vmatprep.subr.bf16.mxu0 %v1720
    %2262 = vmatpush1.bf16.msra.mxu0 %v1719
    %2263 = vmatprep.subr.bf16.mxu0 %v1714
    %2264 = vmatpush1.bf16.msra.mxu0 %v1713
    %2265 = vmatprep.subr.bf16.mxu0 %v1708
    %2266 = vmatpush1.bf16.msra.mxu0 %v1707
    %2267 = vmatprep.subr.bf16.mxu0 %v1798
    %2268 = vmatpush2.bf16.msra.mxu0 %v1797
    %2269 = vmatprep.subr.bf16.mxu0 %v1792
    %2270 = vmatpush2.bf16.msra.mxu0 %v1791
    %2271 = vmatprep.subr.bf16.mxu0 %v1786
    %2272 = vmatpush2.bf16.msra.mxu0 %v1785
    %2273 = vmatprep.subr.bf16.mxu0 %v1780
    %2274 = vmatpush2.bf16.msra.mxu0 %v1779
    %2275 = vmatprep.subr.bf16.mxu0 %v1774
    %2276 = vmatpush2.bf16.msra.mxu0 %v1773
    %2277 = vmatprep.subr.bf16.mxu0 %v1768
    %2278 = vmatpush2.bf16.msra.mxu0 %v1767
    %2279 = vmatprep.subr.bf16.mxu0 %v1762
    %2280 = vmatpush2.bf16.msra.mxu0 %v1761
    %2281 = vmatprep.subr.bf16.mxu0 %v1756
    %2282 = vmatpush2.bf16.msra.mxu0 %v1755
    %2283 = vmatprep.mubr.bf16.mxu0 %v900
    %2284 = vmatmul.mubr.bf16.gmra.mxu0 %v899
    %v2285 = vpop.f32.mrf.mxu0
    %v2286 = vadd.f32 %v1116, %v2285
    %v2287 = vpop.f32.mrf.mxu0
    %v2288 = vadd.f32 %v1120, %v2287
    %v2289 = vpop.f32.mrf.mxu0
    %v2290 = vpop.f32.mrf.mxu0
    %2291 = vdwg.mxu0
    %2292 = vmatprep.subr.bf16.mxu0 %v1846
    %2293 = vmatpush1.bf16.msra.mxu0 %v1845
    %2294 = vmatprep.subr.bf16.mxu0 %v1840
    %2295 = vmatpush1.bf16.msra.mxu0 %v1839
    %2296 = vmatprep.subr.bf16.mxu0 %v1834
    %2297 = vmatpush1.bf16.msra.mxu0 %v1833
    %2298 = vmatprep.subr.bf16.mxu0 %v1828
    %2299 = vmatpush1.bf16.msra.mxu0 %v1827
    %2300 = vmatprep.subr.bf16.mxu0 %v1822
    %2301 = vmatpush1.bf16.msra.mxu0 %v1821
    %2302 = vmatprep.subr.bf16.mxu0 %v1816
    %2303 = vmatpush1.bf16.msra.mxu0 %v1815
    %2304 = vmatprep.subr.bf16.mxu0 %v1810
    %2305 = vmatpush1.bf16.msra.mxu0 %v1809
    %2306 = vmatprep.subr.bf16.mxu0 %v1804
    %2307 = vmatpush1.bf16.msra.mxu0 %v1803
    %2308 = vmatprep.subr.bf16.mxu0 %v1894
    %2309 = vmatpush2.bf16.msra.mxu0 %v1893
    %2310 = vmatprep.subr.bf16.mxu0 %v1888
    %2311 = vmatpush2.bf16.msra.mxu0 %v1887
    %2312 = vmatprep.subr.bf16.mxu0 %v1882
    %2313 = vmatpush2.bf16.msra.mxu0 %v1881
    %2314 = vmatprep.subr.bf16.mxu0 %v1876
    %2315 = vmatpush2.bf16.msra.mxu0 %v1875
    %2316 = vmatprep.subr.bf16.mxu0 %v1870
    %2317 = vmatpush2.bf16.msra.mxu0 %v1869
    %2318 = vmatprep.subr.bf16.mxu0 %v1864
    %2319 = vmatpush2.bf16.msra.mxu0 %v1863
    %2320 = vmatprep.subr.bf16.mxu0 %v1858
    %2321 = vmatpush2.bf16.msra.mxu0 %v1857
    %2322 = vmatprep.subr.bf16.mxu0 %v1852
    %2323 = vmatpush2.bf16.msra.mxu0 %v1851
    %2324 = vmatprep.mubr.bf16.mxu0 %v902
    %2325 = vmatmul.mubr.bf16.gmra.mxu0 %v901
    %v2326 = vpop.f32.mrf.mxu0
    %v2327 = vadd.f32 %v2286, %v2326
    %v2328 = vpop.f32.mrf.mxu0
    %v2329 = vadd.f32 %v2288, %v2328
    %v2330 = vpop.f32.mrf.mxu0
    %v2331 = vpop.f32.mrf.mxu0
    %2332 = vdwg.mxu0
    %v2333 = vmax.f32 %v2163, 0.0
    %v2334 = vmax.f32 %v2165, 0.0
    %v2335 = vmax.f32 %v2245, 0.0
    %v2336 = vmax.f32 %v2247, 0.0
    %v2337 = vmax.f32 %v2327, 0.0
    %v2338 = vmax.f32 %v2329, 0.0
    %v2339 = vpack.c.bf16 %v2333, %v2333
    %v2340 = vpack.c.bf16 %v2334, %v2334
    %v2341 = vpack.c.bf16 %v2335, %v2335
    %v2342 = vpack.c.bf16 %v2336, %v2336
    %v2343 = vpack.c.bf16 %v2337, %v2337
    %v2344 = vpack.c.bf16 %v2338, %v2338
    %v2345 = vld [vmem:[#allocation10] sm:$0xf]
    %v2346 = vld [vmem:[#allocation10 + $0x4] sm:$0xf]
    %v2347 = vld [vmem:[#allocation10 + $0x8] sm:$0xf]
    %v2348 = vld [vmem:[#allocation10 + $0xc] sm:$0xf]
    %v2349 = vld [vmem:[#allocation10 + $0x10] sm:$0xf]
    %v2350 = vld [vmem:[#allocation10 + $0x14] sm:$0xf]
    %v2351 = vld [vmem:[#allocation10 + $0x18] sm:$0xf]
    %v2352 = vld [vmem:[#allocation10 + $0x1c] sm:$0xf]
    %v2353 = vld [vmem:[#allocation10 + $0x20] sm:$0xf]
    %v2354 = vld [vmem:[#allocation10 + $0x24] sm:$0xf]
    %v2355 = vld [vmem:[#allocation10 + $0x28] sm:$0xf]
    %v2356 = vld [vmem:[#allocation10 + $0x2c] sm:$0xf]
    %v2357 = vld [vmem:[#allocation10 + $0x30] sm:$0xf]
    %v2358 = vld [vmem:[#allocation10 + $0x34] sm:$0xf]
    %v2359 = vld [vmem:[#allocation10 + $0x38] sm:$0xf]
    %v2360 = vld [vmem:[#allocation10 + $0x3c] sm:$0xf]
    %v2361 = vld [vmem:[#allocation10 + $0x40] sm:$0xf]
    %v2362 = vld [vmem:[#allocation10 + $0x44] sm:$0xf]
    %v2363 = vld [vmem:[#allocation10 + $0x48] sm:$0xf]
    %v2364 = vld [vmem:[#allocation10 + $0x4c] sm:$0xf]
    %v2365 = vld [vmem:[#allocation10 + $0x50] sm:$0xf]
    %v2366 = vld [vmem:[#allocation10 + $0x54] sm:$0xf]
    %v2367 = vld [vmem:[#allocation10 + $0x58] sm:$0xf]
    %v2368 = vld [vmem:[#allocation10 + $0x5c] sm:$0xf]
    %v2369 = vld [vmem:[#allocation10 + $0x60] sm:$0xf]
    %v2370 = vld [vmem:[#allocation10 + $0x64] sm:$0xf]
    %v2371 = vld [vmem:[#allocation10 + $0x68] sm:$0xf]
    %v2372 = vld [vmem:[#allocation10 + $0x6c] sm:$0xf]
    %v2373 = vld [vmem:[#allocation10 + $0x70] sm:$0xf]
    %v2374 = vld [vmem:[#allocation10 + $0x74] sm:$0xf]
    %v2375 = vld [vmem:[#allocation10 + $0x78] sm:$0xf]
    %v2376 = vld [vmem:[#allocation10 + $0x7c] sm:$0xf]
    %v2377 = vld [vmem:[#allocation10 + $0x80] sm:$0xf]
    %v2378 = vld [vmem:[#allocation10 + $0x84] sm:$0xf]
    %v2379 = vld [vmem:[#allocation10 + $0x88] sm:$0xf]
    %v2380 = vld [vmem:[#allocation10 + $0x8c] sm:$0xf]
    %v2381 = vld [vmem:[#allocation10 + $0x90] sm:$0xf]
    %v2382 = vld [vmem:[#allocation10 + $0x94] sm:$0xf]
    %v2383 = vld [vmem:[#allocation10 + $0x98] sm:$0xf]
    %v2384 = vld [vmem:[#allocation10 + $0x9c] sm:$0xf]
    %v2385 = vld [vmem:[#allocation10 + $0xa0] sm:$0xf]
    %v2386 = vld [vmem:[#allocation10 + $0xa4] sm:$0xf]
    %v2387 = vld [vmem:[#allocation10 + $0xa8] sm:$0xf]
    %v2388 = vld [vmem:[#allocation10 + $0xac] sm:$0xf]
    %v2389 = vld [vmem:[#allocation10 + $0xb0] sm:$0xf]
    %v2390 = vld [vmem:[#allocation10 + $0xb4] sm:$0xf]
    %v2391 = vld [vmem:[#allocation10 + $0xb8] sm:$0xf]
    %v2392 = vld [vmem:[#allocation10 + $0xbc] sm:$0xf]
    %v2393 = vld [vmem:[#allocation10 + $0xc0] sm:$0xf]
    %v2394 = vld [vmem:[#allocation10 + $0xc4] sm:$0xf]
    %v2395 = vld [vmem:[#allocation10 + $0xc8] sm:$0xf]
    %v2396 = vld [vmem:[#allocation10 + $0xcc] sm:$0xf]
    %v2397 = vld [vmem:[#allocation10 + $0xd0] sm:$0xf]
    %v2398 = vld [vmem:[#allocation10 + $0xd4] sm:$0xf]
    %v2399 = vld [vmem:[#allocation10 + $0xd8] sm:$0xf]
    %v2400 = vld [vmem:[#allocation10 + $0xdc] sm:$0xf]
    %v2401 = vld [vmem:[#allocation10 + $0xe0] sm:$0xf]
    %v2402 = vld [vmem:[#allocation10 + $0xe4] sm:$0xf]
    %v2403 = vld [vmem:[#allocation10 + $0xe8] sm:$0xf]
    %v2404 = vld [vmem:[#allocation10 + $0xec] sm:$0xf]
    %v2405 = vld [vmem:[#allocation10 + $0xf0] sm:$0xf]
    %v2406 = vld [vmem:[#allocation10 + $0xf4] sm:$0xf]
    %v2407 = vld [vmem:[#allocation10 + $0xf8] sm:$0xf]
    %v2408 = vld [vmem:[#allocation10 + $0xfc] sm:$0xf]
    %v2409 = vld [vmem:[#allocation10 + $0x100] sm:$0xf]
    %v2410 = vld [vmem:[#allocation10 + $0x104] sm:$0xf]
    %v2411 = vld [vmem:[#allocation10 + $0x108] sm:$0xf]
    %v2412 = vld [vmem:[#allocation10 + $0x10c] sm:$0xf]
    %v2413 = vld [vmem:[#allocation10 + $0x110] sm:$0xf]
    %v2414 = vld [vmem:[#allocation10 + $0x114] sm:$0xf]
    %v2415 = vld [vmem:[#allocation10 + $0x118] sm:$0xf]
    %v2416 = vld [vmem:[#allocation10 + $0x11c] sm:$0xf]
    %v2417 = vld [vmem:[#allocation10 + $0x120] sm:$0xf]
    %v2418 = vld [vmem:[#allocation10 + $0x124] sm:$0xf]
    %v2419 = vld [vmem:[#allocation10 + $0x128] sm:$0xf]
    %v2420 = vld [vmem:[#allocation10 + $0x12c] sm:$0xf]
    %v2421 = vld [vmem:[#allocation10 + $0x130] sm:$0xf]
    %v2422 = vld [vmem:[#allocation10 + $0x134] sm:$0xf]
    %v2423 = vld [vmem:[#allocation10 + $0x138] sm:$0xf]
    %v2424 = vld [vmem:[#allocation10 + $0x13c] sm:$0xf]
    %v2425 = vld [vmem:[#allocation10 + $0x140] sm:$0xf]
    %v2426 = vld [vmem:[#allocation10 + $0x144] sm:$0xf]
    %v2427 = vld [vmem:[#allocation10 + $0x148] sm:$0xf]
    %v2428 = vld [vmem:[#allocation10 + $0x14c] sm:$0xf]
    %v2429 = vld [vmem:[#allocation10 + $0x150] sm:$0xf]
    %v2430 = vld [vmem:[#allocation10 + $0x154] sm:$0xf]
    %v2431 = vld [vmem:[#allocation10 + $0x158] sm:$0xf]
    %v2432 = vld [vmem:[#allocation10 + $0x15c] sm:$0xf]
    %v2433 = vld [vmem:[#allocation10 + $0x160] sm:$0xf]
    %v2434 = vld [vmem:[#allocation10 + $0x164] sm:$0xf]
    %v2435 = vld [vmem:[#allocation10 + $0x168] sm:$0xf]
    %v2436 = vld [vmem:[#allocation10 + $0x16c] sm:$0xf]
    %v2437 = vld [vmem:[#allocation10 + $0x170] sm:$0xf]
    %v2438 = vld [vmem:[#allocation10 + $0x174] sm:$0xf]
    %v2439 = vld [vmem:[#allocation10 + $0x178] sm:$0xf]
    %v2440 = vld [vmem:[#allocation10 + $0x17c] sm:$0xf]
    %v2441 = vld [vmem:[%s6] sm:$0x1]
    %v2443 = vlaneseq
    %v2444 = vshrl.u32 %v2443, 7
    %v2445 = vsub.s32 0, %v2444
    %v2446 = vrot.slane %v2441, %v2445
    %v2544 = vunpack.c.l.b16 %v2345
    %v2545 = vunpack.c.l.b16 %v2346
    %v2546 = vunpack.c.l.b16 %v2347
    %v2547 = vunpack.c.l.b16 %v2348
    %v2548 = vunpack.c.l.b16 %v2349
    %v2549 = vunpack.c.l.b16 %v2350
    %v2550 = vunpack.c.l.b16 %v2351
    %v2551 = vunpack.c.l.b16 %v2352
    %v2552 = vunpack.c.l.b16 %v2353
    %v2553 = vunpack.c.l.b16 %v2354
    %v2554 = vunpack.c.l.b16 %v2355
    %v2555 = vunpack.c.l.b16 %v2356
    %v2556 = vunpack.c.l.b16 %v2357
    %v2557 = vunpack.c.l.b16 %v2358
    %v2558 = vunpack.c.l.b16 %v2359
    %v2559 = vunpack.c.l.b16 %v2360
    %v2560 = vunpack.c.l.b16 %v2361
    %v2561 = vunpack.c.l.b16 %v2362
    %v2562 = vunpack.c.l.b16 %v2363
    %v2563 = vunpack.c.l.b16 %v2364
    %v2564 = vunpack.c.l.b16 %v2365
    %v2565 = vunpack.c.l.b16 %v2366
    %v2566 = vunpack.c.l.b16 %v2367
    %v2567 = vunpack.c.l.b16 %v2368
    %v2568 = vunpack.c.l.b16 %v2369
    %v2569 = vunpack.c.l.b16 %v2370
    %v2570 = vunpack.c.l.b16 %v2371
    %v2571 = vunpack.c.l.b16 %v2372
    %v2572 = vunpack.c.l.b16 %v2373
    %v2573 = vunpack.c.l.b16 %v2374
    %v2574 = vunpack.c.l.b16 %v2375
    %v2575 = vunpack.c.l.b16 %v2376
    %v2576 = vunpack.c.l.b16 %v2377
    %v2577 = vunpack.c.l.b16 %v2378
    %v2578 = vunpack.c.l.b16 %v2379
    %v2579 = vunpack.c.l.b16 %v2380
    %v2580 = vunpack.c.l.b16 %v2381
    %v2581 = vunpack.c.l.b16 %v2382
    %v2582 = vunpack.c.l.b16 %v2383
    %v2583 = vunpack.c.l.b16 %v2384
    %v2584 = vunpack.c.l.b16 %v2385
    %v2585 = vunpack.c.l.b16 %v2386
    %v2586 = vunpack.c.l.b16 %v2387
    %v2587 = vunpack.c.l.b16 %v2388
    %v2588 = vunpack.c.l.b16 %v2389
    %v2589 = vunpack.c.l.b16 %v2390
    %v2590 = vunpack.c.l.b16 %v2391
    %v2591 = vunpack.c.l.b16 %v2392
    %v2592 = vunpack.c.l.b16 %v2393
    %v2593 = vunpack.c.l.b16 %v2394
    %v2594 = vunpack.c.l.b16 %v2395
    %v2595 = vunpack.c.l.b16 %v2396
    %v2596 = vunpack.c.l.b16 %v2397
    %v2597 = vunpack.c.l.b16 %v2398
    %v2598 = vunpack.c.l.b16 %v2399
    %v2599 = vunpack.c.l.b16 %v2400
    %v2600 = vunpack.c.l.b16 %v2401
    %v2601 = vunpack.c.l.b16 %v2402
    %v2602 = vunpack.c.l.b16 %v2403
    %v2603 = vunpack.c.l.b16 %v2404
    %v2604 = vunpack.c.l.b16 %v2405
    %v2605 = vunpack.c.l.b16 %v2406
    %v2606 = vunpack.c.l.b16 %v2407
    %v2607 = vunpack.c.l.b16 %v2408
    %v2608 = vunpack.c.l.b16 %v2409
    %v2609 = vunpack.c.l.b16 %v2410
    %v2610 = vunpack.c.l.b16 %v2411
    %v2611 = vunpack.c.l.b16 %v2412
    %v2612 = vunpack.c.l.b16 %v2413
    %v2613 = vunpack.c.l.b16 %v2414
    %v2614 = vunpack.c.l.b16 %v2415
    %v2615 = vunpack.c.l.b16 %v2416
    %v2616 = vunpack.c.l.b16 %v2417
    %v2617 = vunpack.c.l.b16 %v2418
    %v2618 = vunpack.c.l.b16 %v2419
    %v2619 = vunpack.c.l.b16 %v2420
    %v2620 = vunpack.c.l.b16 %v2421
    %v2621 = vunpack.c.l.b16 %v2422
    %v2622 = vunpack.c.l.b16 %v2423
    %v2623 = vunpack.c.l.b16 %v2424
    %v2624 = vunpack.c.l.b16 %v2425
    %v2625 = vunpack.c.l.b16 %v2426
    %v2626 = vunpack.c.l.b16 %v2427
    %v2627 = vunpack.c.l.b16 %v2428
    %v2628 = vunpack.c.l.b16 %v2429
    %v2629 = vunpack.c.l.b16 %v2430
    %v2630 = vunpack.c.l.b16 %v2431
    %v2631 = vunpack.c.l.b16 %v2432
    %v2632 = vunpack.c.l.b16 %v2433
    %v2633 = vunpack.c.l.b16 %v2434
    %v2634 = vunpack.c.l.b16 %v2435
    %v2635 = vunpack.c.l.b16 %v2436
    %v2636 = vunpack.c.l.b16 %v2437
    %v2637 = vunpack.c.l.b16 %v2438
    %v2638 = vunpack.c.l.b16 %v2439
    %v2639 = vunpack.c.l.b16 %v2440
    %v2640 = vpack.c.b16 %v2545, %v2544
    %v2641 = vpack.c.b16 %v2547, %v2546
    %v2642 = vpack.c.b16 %v2549, %v2548
    %v2643 = vpack.c.b16 %v2551, %v2550
    %v2644 = vpack.c.b16 %v2553, %v2552
    %v2645 = vpack.c.b16 %v2555, %v2554
    %v2646 = vpack.c.b16 %v2557, %v2556
    %v2647 = vpack.c.b16 %v2559, %v2558
    %v2648 = vpack.c.b16 %v2561, %v2560
    %v2649 = vpack.c.b16 %v2563, %v2562
    %v2650 = vpack.c.b16 %v2565, %v2564
    %v2651 = vpack.c.b16 %v2567, %v2566
    %v2652 = vpack.c.b16 %v2569, %v2568
    %v2653 = vpack.c.b16 %v2571, %v2570
    %v2654 = vpack.c.b16 %v2573, %v2572
    %v2655 = vpack.c.b16 %v2575, %v2574
    %v2656 = vpack.c.b16 %v2577, %v2576
    %v2657 = vpack.c.b16 %v2579, %v2578
    %v2658 = vpack.c.b16 %v2581, %v2580
    %v2659 = vpack.c.b16 %v2583, %v2582
    %v2660 = vpack.c.b16 %v2585, %v2584
    %v2661 = vpack.c.b16 %v2587, %v2586
    %v2662 = vpack.c.b16 %v2589, %v2588
    %v2663 = vpack.c.b16 %v2591, %v2590
    %v2664 = vpack.c.b16 %v2593, %v2592
    %v2665 = vpack.c.b16 %v2595, %v2594
    %v2666 = vpack.c.b16 %v2597, %v2596
    %v2667 = vpack.c.b16 %v2599, %v2598
    %v2668 = vpack.c.b16 %v2601, %v2600
    %v2669 = vpack.c.b16 %v2603, %v2602
    %v2670 = vpack.c.b16 %v2605, %v2604
    %v2671 = vpack.c.b16 %v2607, %v2606
    %v2672 = vpack.c.b16 %v2609, %v2608
    %v2673 = vpack.c.b16 %v2611, %v2610
    %v2674 = vpack.c.b16 %v2613, %v2612
    %v2675 = vpack.c.b16 %v2615, %v2614
    %v2676 = vpack.c.b16 %v2617, %v2616
    %v2677 = vpack.c.b16 %v2619, %v2618
    %v2678 = vpack.c.b16 %v2621, %v2620
    %v2679 = vpack.c.b16 %v2623, %v2622
    %v2680 = vpack.c.b16 %v2625, %v2624
    %v2681 = vpack.c.b16 %v2627, %v2626
    %v2682 = vpack.c.b16 %v2629, %v2628
    %v2683 = vpack.c.b16 %v2631, %v2630
    %v2684 = vpack.c.b16 %v2633, %v2632
    %v2685 = vpack.c.b16 %v2635, %v2634
    %v2686 = vpack.c.b16 %v2637, %v2636
    %v2687 = vpack.c.b16 %v2639, %v2638
    %2736 = vmatprep.subr.bf16.mxu0 0
    %2737 = vmatpush1.bf16.msra.mxu0 %v2647
    %2738 = vmatprep.subr.bf16.mxu0 0
    %2739 = vmatpush1.bf16.msra.mxu0 %v2646
    %2740 = vmatprep.subr.bf16.mxu0 0
    %2741 = vmatpush1.bf16.msra.mxu0 %v2645
    %2742 = vmatprep.subr.bf16.mxu0 0
    %2743 = vmatpush1.bf16.msra.mxu0 %v2644
    %2744 = vmatprep.subr.bf16.mxu0 0
    %2745 = vmatpush1.bf16.msra.mxu0 %v2643
    %2746 = vmatprep.subr.bf16.mxu0 0
    %2747 = vmatpush1.bf16.msra.mxu0 %v2642
    %2748 = vmatprep.subr.bf16.mxu0 0
    %2749 = vmatpush1.bf16.msra.mxu0 %v2641
    %2750 = vmatprep.subr.bf16.mxu0 0
    %2751 = vmatpush1.bf16.msra.mxu0 %v2640
    %2752 = vmatprep.subr.bf16.mxu0 0
    %2753 = vmatpush2.bf16.msra.mxu0 %v2655
    %2754 = vmatprep.subr.bf16.mxu0 0
    %2755 = vmatpush2.bf16.msra.mxu0 %v2654
    %2756 = vmatprep.subr.bf16.mxu0 0
    %2757 = vmatpush2.bf16.msra.mxu0 %v2653
    %2758 = vmatprep.subr.bf16.mxu0 0
    %2759 = vmatpush2.bf16.msra.mxu0 %v2652
    %2760 = vmatprep.subr.bf16.mxu0 0
    %2761 = vmatpush2.bf16.msra.mxu0 %v2651
    %2762 = vmatprep.subr.bf16.mxu0 0
    %2763 = vmatpush2.bf16.msra.mxu0 %v2650
    %2764 = vmatprep.subr.bf16.mxu0 0
    %2765 = vmatpush2.bf16.msra.mxu0 %v2649
    %2766 = vmatprep.subr.bf16.mxu0 0
    %2767 = vmatpush2.bf16.msra.mxu0 %v2648
    %2768 = vmatprep.mubr.bf16.mxu0 %v2340
    %2769 = vmatmul.mubr.bf16.gmra.mxu0 %v2339
    %v2770 = vpop.f32.mrf.mxu0
    %v2771 = vadd.f32 %v2446, %v2770
    %v2772 = vpop.f32.mrf.mxu0
    %v2773 = vpop.f32.mrf.mxu0
    %v2774 = vpop.f32.mrf.mxu0
    %2775 = vdwg.mxu0
    %2776 = vmatprep.subr.bf16.mxu0 0
    %2777 = vmatpush1.bf16.msra.mxu0 %v2663
    %2778 = vmatprep.subr.bf16.mxu0 0
    %2779 = vmatpush1.bf16.msra.mxu0 %v2662
    %2780 = vmatprep.subr.bf16.mxu0 0
    %2781 = vmatpush1.bf16.msra.mxu0 %v2661
    %2782 = vmatprep.subr.bf16.mxu0 0
    %2783 = vmatpush1.bf16.msra.mxu0 %v2660
    %2784 = vmatprep.subr.bf16.mxu0 0
    %2785 = vmatpush1.bf16.msra.mxu0 %v2659
    %2786 = vmatprep.subr.bf16.mxu0 0
    %2787 = vmatpush1.bf16.msra.mxu0 %v2658
    %2788 = vmatprep.subr.bf16.mxu0 0
    %2789 = vmatpush1.bf16.msra.mxu0 %v2657
    %2790 = vmatprep.subr.bf16.mxu0 0
    %2791 = vmatpush1.bf16.msra.mxu0 %v2656
    %2792 = vmatprep.subr.bf16.mxu0 0
    %2793 = vmatpush2.bf16.msra.mxu0 %v2671
    %2794 = vmatprep.subr.bf16.mxu0 0
    %2795 = vmatpush2.bf16.msra.mxu0 %v2670
    %2796 = vmatprep.subr.bf16.mxu0 0
    %2797 = vmatpush2.bf16.msra.mxu0 %v2669
    %2798 = vmatprep.subr.bf16.mxu0 0
    %2799 = vmatpush2.bf16.msra.mxu0 %v2668
    %2800 = vmatprep.subr.bf16.mxu0 0
    %2801 = vmatpush2.bf16.msra.mxu0 %v2667
    %2802 = vmatprep.subr.bf16.mxu0 0
    %2803 = vmatpush2.bf16.msra.mxu0 %v2666
    %2804 = vmatprep.subr.bf16.mxu0 0
    %2805 = vmatpush2.bf16.msra.mxu0 %v2665
    %2806 = vmatprep.subr.bf16.mxu0 0
    %2807 = vmatpush2.bf16.msra.mxu0 %v2664
    %2808 = vmatprep.mubr.bf16.mxu0 %v2342
    %2809 = vmatmul.mubr.bf16.gmra.mxu0 %v2341
    %v2810 = vpop.f32.mrf.mxu0
    %v2811 = vadd.f32 %v2771, %v2810
    %v2812 = vpop.f32.mrf.mxu0
    %v2813 = vpop.f32.mrf.mxu0
    %v2814 = vpop.f32.mrf.mxu0
    %2815 = vdwg.mxu0
    %2816 = vmatprep.subr.bf16.mxu0 0
    %2817 = vmatpush1.bf16.msra.mxu0 %v2679
    %2818 = vmatprep.subr.bf16.mxu0 0
    %2819 = vmatpush1.bf16.msra.mxu0 %v2678
    %2820 = vmatprep.subr.bf16.mxu0 0
    %2821 = vmatpush1.bf16.msra.mxu0 %v2677
    %2822 = vmatprep.subr.bf16.mxu0 0
    %2823 = vmatpush1.bf16.msra.mxu0 %v2676
    %2824 = vmatprep.subr.bf16.mxu0 0
    %2825 = vmatpush1.bf16.msra.mxu0 %v2675
    %2826 = vmatprep.subr.bf16.mxu0 0
    %2827 = vmatpush1.bf16.msra.mxu0 %v2674
    %2828 = vmatprep.subr.bf16.mxu0 0
    %2829 = vmatpush1.bf16.msra.mxu0 %v2673
    %2830 = vmatprep.subr.bf16.mxu0 0
    %2831 = vmatpush1.bf16.msra.mxu0 %v2672
    %2832 = vmatprep.subr.bf16.mxu0 0
    %2833 = vmatpush2.bf16.msra.mxu0 %v2687
    %2834 = vmatprep.subr.bf16.mxu0 0
    %2835 = vmatpush2.bf16.msra.mxu0 %v2686
    %2836 = vmatprep.subr.bf16.mxu0 0
    %2837 = vmatpush2.bf16.msra.mxu0 %v2685
    %2838 = vmatprep.subr.bf16.mxu0 0
    %2839 = vmatpush2.bf16.msra.mxu0 %v2684
    %2840 = vmatprep.subr.bf16.mxu0 0
    %2841 = vmatpush2.bf16.msra.mxu0 %v2683
    %2842 = vmatprep.subr.bf16.mxu0 0
    %2843 = vmatpush2.bf16.msra.mxu0 %v2682
    %2844 = vmatprep.subr.bf16.mxu0 0
    %2845 = vmatpush2.bf16.msra.mxu0 %v2681
    %2846 = vmatprep.subr.bf16.mxu0 0
    %2847 = vmatpush2.bf16.msra.mxu0 %v2680
    %2848 = vmatprep.mubr.bf16.mxu0 %v2344
    %2849 = vmatmul.mubr.bf16.gmra.mxu0 %v2343
    %v2850 = vpop.f32.mrf.mxu0
    %v2851 = vadd.f32 %v2811, %v2850
    %v2852 = vpop.f32.mrf.mxu0
    %v2853 = vpop.f32.mrf.mxu0
    %v2854 = vpop.f32.mrf.mxu0
    %2855 = vdwg.mxu0
    %2856 = vst [vmem:[#allocation11] sm:$0xff] %v2851
    // Predicated region
    $region50: #{tpu_custom_call.1} parent=1 // pred_check
      _
    $region51: #{tpu_custom_call.1} parent=1 // pred_check_branch
      %2858 = sbr.rel (0) target = $region53
    $region52: #{tpu_custom_call.1} parent=1 // pred_region
      %s2860 = ssub.s32 128, 128
      %2861 = vsyncadd [#allocation4], %s2860
      %s2863 = sshll.u32 [#allocation11], 4
      %s2864 = int_to_ptr.vmem [resolvable:$true] %s2863
      %2866 = dma.vmem_to_hbm [thread:$0]  %s2864, 128, %s7, [#allocation4]
    $region53: #{tpu_custom_call.1} parent=1 // pred_fallthru
      _
    // Predicated region
    $region54: #{tpu_custom_call.1} parent=1 // pred_check
      _
    $region55: #{tpu_custom_call.1} parent=1 // pred_check_branch
      %2868 = sbr.rel (0) target = $region57
    $region56: #{tpu_custom_call.1} parent=1 // pred_region
      %2869 = dma.done [#allocation4], 128
    $region57: #{tpu_custom_call.1} parent=1 // pred_fallthru
      _
    %2870 = vsyncpa [#allocation3], 1
    %2871 = vsyncpa [#allocation6], 1
    %2872 = vsyncpa [#allocation9], 1
    %2873 = vsyncpa [#allocation4], 1

</llo_original>
